<compile_context>
chip_gen: v7x
topology: tpu7x:2x2x1
jax: 0.10.0
libtpu: 0.0.40
codegen_flags: <defaults>
</compile_context>

<pallas_src>
import functools
import math

import jax
import jax.numpy as jnp
from jax import lax
from jax.experimental import pallas as pl
from jax.experimental.pallas import tpu as pltpu

FFN_MULT = 4
LN_EPS = 1e-5
NEG_INF = -1e30


def _layernorm_f32(y, gamma, beta):
  mu = jnp.mean(y, axis=-1, keepdims=True)
  var = jnp.mean((y - mu) * (y - mu), axis=-1, keepdims=True)
  return (y - mu) * lax.rsqrt(var + LN_EPS) * gamma + beta


def detr_encoder_layer_kernel(
    x_ref, pe_ref,
    wqk_ref, bqk_ref, wv_ref, bv_ref, wo_ref, bo_ref,
    ln1_g_ref, ln1_b_ref,
    w1_ref, b1_ref, w2_ref, b2_ref,
    ln2_g_ref, ln2_b_ref,
    out_ref,
    q_scr, k_scr, v_scr,
    *, n_heads, tq, s_true):
  """grid = (batch, query_tile).  Projections cached in scratch at tile 0."""
  S_pad, D = x_ref.shape[1], x_ref.shape[2]
  hd = D // n_heads
  qt = pl.program_id(1)

  # ---- once per batch element: fused [Q|K] + V projections ------------------
  @pl.when(qt == 0)
  def _():
    x_kv = x_ref[0]                                      # (S_pad, D) f32
    qk_in = (x_kv + pe_ref[0]).astype(jnp.bfloat16)      # q = k input
    qk = jnp.dot(qk_in, wqk_ref[...],
                 preferred_element_type=jnp.float32) + bqk_ref[...]   # (S, 2D)
    v = jnp.dot(x_kv.astype(jnp.bfloat16), wv_ref[...],
                preferred_element_type=jnp.float32) + bv_ref[...]     # (S, D)
    # K stored pre-transposed (H, hd, S): lane-dense in S, one transpose +
    # one dense store; the per-tile score matmul RHS then needs no transpose.
    k_scr[...] = (jnp.transpose(qk[:, D:])
                  .reshape(n_heads, hd, S_pad).astype(jnp.bfloat16))
    for h in range(n_heads):                             # static unroll
      q_scr[h] = qk[:, h * hd:(h + 1) * hd].astype(jnp.bfloat16)   # scale pre-folded
      v_scr[h] = v[:, h * hd:(h + 1) * hd].astype(jnp.bfloat16)

  # ---- batched multi-head attention for this query tile ---------------------
  row0 = pl.multiple_of(qt * tq, tq)
  q = q_scr[:, pl.ds(row0, tq), :]                       # (H, TQ, hd) bf16
  s = jnp.einsum("hqd,hdk->hqk", q, k_scr[...],
                 preferred_element_type=jnp.float32)     # (H, TQ, S_pad) f32
  if s_true < S_pad:                                     # static branch
    key_id = lax.broadcasted_iota(jnp.int32, (1, 1, S_pad), 2)
    s = jnp.where(key_id < s_true, s, NEG_INF)           # mask padded keys
  s = s - jnp.max(s, axis=-1, keepdims=True)
  p = jnp.exp(s)                                         # f32 exp (v5e-safe)
  l = jnp.sum(p, axis=-1, keepdims=True)                 # (H, TQ, 1)
  ctx_h = jnp.einsum("hqk,hkd->hqd", p.astype(jnp.bfloat16), v_scr[...],
                     preferred_element_type=jnp.float32)  # (H, TQ, hd)
  # Deferred softmax normalization (MXU is linear in p): TQ*D multiplies only.
  ctx_h = ctx_h * pl.reciprocal(l, approx=True)
  ctx = jnp.transpose(ctx_h, (1, 0, 2)).reshape(tq, D)    # merge heads
  attn = jnp.dot(ctx.astype(jnp.bfloat16), wo_ref[...],
                 preferred_element_type=jnp.float32) + bo_ref[...]

  # ---- residual + LayerNorm1 (DropPath == identity at inference) ------------
  x_res = x_ref[0, pl.ds(row0, tq), :].astype(jnp.float32)   # (TQ, D) residual
  y = _layernorm_f32(x_res + attn, ln1_g_ref[...], ln1_b_ref[...])

  # ---- FFN: Linear -> ReLU -> Linear (bf16 MXU operands, f32 accum) ---------
  h1 = jnp.dot(y.astype(jnp.bfloat16), w1_ref[...],
               preferred_element_type=jnp.float32) + b1_ref[...]
  h1 = jnp.maximum(h1, 0.0)
  z = jnp.dot(h1.astype(jnp.bfloat16), w2_ref[...],
              preferred_element_type=jnp.float32) + b2_ref[...]

  # ---- residual + LayerNorm2 -------------------------------------------------
  out = _layernorm_f32(y + z, ln2_g_ref[...], ln2_b_ref[...])
  out_ref[0] = out.astype(out_ref.dtype)


def _round_up(x, m):
  return ((x + m - 1) // m) * m


def detr_encoder_layer(x, x_pe, params, *, n_heads):
  B, S, D = x.shape
  assert D % n_heads == 0, "n_heads must divide embed_dim"
  F = params["w1"].shape[1]
  hd = D // n_heads
  scale = 1.0 / math.sqrt(hd)

  # Query-tile policy: prefer TQ=128 (bounded score memory, nq>=8 pipelining);
  # pad ragged S to a multiple of 128 and mask padded keys inside the kernel.
  if S <= 128:
    S_pad, tq = S, S
  else:
    S_pad, tq = _round_up(S, 128), 128
  nq = S_pad // tq

  if S_pad != S:
    pad = ((0, 0), (0, S_pad - S), (0, 0))
    x_in, pe_in = jnp.pad(x, pad), jnp.pad(x_pe, pad)
  else:
    x_in, pe_in = x, x_pe

  bf16 = jnp.bfloat16
  # Host-side prep: fold 1/sqrt(hd) into Wq/bq, fuse [Q|K]; MXU weights -> bf16.
  wqk = jnp.concatenate([params["wq"] * scale, params["wk"]], axis=1).astype(bf16)
  bqk = jnp.concatenate([params["bq"] * scale, params["bk"]], axis=1)   # f32

  kv_full = pl.BlockSpec((1, S_pad, D), lambda b, q: (b, 0, 0))
  full2d = lambda r, c: pl.BlockSpec((r, c), lambda b, q: (0, 0))
  out_spec = pl.BlockSpec((1, tq, D), lambda b, q: (b, q, 0))
  # TODO(synk): pipeline_mode=pl.Buffered(1) on the constant-index blocks would
  #             reclaim their second VMEM buffer; skipped to stay conservative.

  in_specs = [
      kv_full, kv_full,                     # x, x_pe (full sequence)
      full2d(D, 2 * D), full2d(1, 2 * D),   # wqk, bqk (fused, scale folded)
      full2d(D, D), full2d(1, D),           # wv, bv
      full2d(D, D), full2d(1, D),           # wo, bo
      full2d(1, D), full2d(1, D),           # ln1 gamma, beta
      full2d(D, F), full2d(1, F),           # w1, b1
      full2d(F, D), full2d(1, D),           # w2, b2
      full2d(1, D), full2d(1, D),           # ln2 gamma, beta
  ]

  kernel = functools.partial(detr_encoder_layer_kernel,
                             n_heads=n_heads, tq=tq, s_true=S)
  out = pl.pallas_call(
      kernel,
      out_shape=jax.ShapeDtypeStruct((B, S_pad, D), x.dtype),
      grid_spec=pltpu.PrefetchScalarGridSpec(
          num_scalar_prefetch=0,
          grid=(B, nq),
          in_specs=in_specs,
          out_specs=out_spec,
          scratch_shapes=[
              pltpu.VMEM((n_heads, S_pad, hd), bf16),   # Q  (head-major)
              pltpu.VMEM((n_heads, hd, S_pad), bf16),   # K^T (S on lanes)
              pltpu.VMEM((n_heads, S_pad, hd), bf16),   # V  (head-major)
          ],
      ),
      compiler_params=pltpu.CompilerParams(
          # B parallel (megacore); query-tile axis sequential because tile 0
          # fills the Q/K/V scratch reused by later tiles of the same batch.
          dimension_semantics=("parallel", "arbitrary"),
          vmem_limit_bytes=48 * 1024 * 1024,   # fits v7x's 64 MiB with headroom
      ),
  )(x_in, pe_in,
    wqk, bqk,
    params["wv"].astype(bf16), params["bv"],
    params["wo"].astype(bf16), params["bo"],
    params["ln1_g"], params["ln1_b"],
    params["w1"].astype(bf16), params["b1"],
    params["w2"].astype(bf16), params["b2"],
    params["ln2_g"], params["ln2_b"])
  if S_pad != S:
    out = out[:, :S, :]
  return out


def make_params(key, embed_dim, ffn_dim):
  ks = jax.random.split(key, 8)
  n = lambda k, shape: (0.02 * jax.random.normal(k, shape)).astype(jnp.float32)
  return {
      "wq": n(ks[0], (embed_dim, embed_dim)), "bq": jnp.zeros((1, embed_dim), jnp.float32),
      "wk": n(ks[1], (embed_dim, embed_dim)), "bk": jnp.zeros((1, embed_dim), jnp.float32),
      "wv": n(ks[2], (embed_dim, embed_dim)), "bv": jnp.zeros((1, embed_dim), jnp.float32),
      "wo": n(ks[3], (embed_dim, embed_dim)), "bo": jnp.zeros((1, embed_dim), jnp.float32),
      "ln1_g": jnp.ones((1, embed_dim), jnp.float32),
      "ln1_b": jnp.zeros((1, embed_dim), jnp.float32),
      "w1": n(ks[4], (embed_dim, ffn_dim)), "b1": jnp.zeros((1, ffn_dim), jnp.float32),
      "w2": n(ks[5], (ffn_dim, embed_dim)), "b2": jnp.zeros((1, embed_dim), jnp.float32),
      "ln2_g": jnp.ones((1, embed_dim), jnp.float32),
      "ln2_b": jnp.zeros((1, embed_dim), jnp.float32),
  }


def reference(x, x_pe, params, *, n_heads):
  """Pure-JAX reference mirroring the PyTorch forward (eval mode), f32."""
  B, S, D = x.shape
  hd = D // n_heads
  hp = jax.lax.Precision.HIGHEST

  qk_in = x + x_pe
  q = jnp.einsum("bsd,de->bse", qk_in, params["wq"], precision=hp) + params["bq"]
  k = jnp.einsum("bsd,de->bse", qk_in, params["wk"], precision=hp) + params["bk"]
  v = jnp.einsum("bsd,de->bse", x, params["wv"], precision=hp) + params["bv"]
  q = q.reshape(B, S, n_heads, hd); k = k.reshape(B, S, n_heads, hd)
  v = v.reshape(B, S, n_heads, hd)
  s = jnp.einsum("bqhd,bkhd->bhqk", q, k, precision=hp) / (hd ** 0.5)
  p = jax.nn.softmax(s, axis=-1)
  ctx = jnp.einsum("bhqk,bkhd->bqhd", p, v, precision=hp).reshape(B, S, D)
  attn = jnp.einsum("bsd,de->bse", ctx, params["wo"], precision=hp) + params["bo"]

  def ln(t, g, b):
    mu = jnp.mean(t, axis=-1, keepdims=True)
    var = jnp.mean((t - mu) ** 2, axis=-1, keepdims=True)
    return (t - mu) / jnp.sqrt(var + LN_EPS) * g + b

  y = ln(x + attn, params["ln1_g"], params["ln1_b"])
  h = jax.nn.relu(jnp.einsum("bsd,df->bsf", y, params["w1"], precision=hp) + params["b1"])
  z = jnp.einsum("bsf,fd->bsd", h, params["w2"], precision=hp) + params["b2"]
  return ln(y + z, params["ln2_g"], params["ln2_b"])


if __name__ == "__main__":
  B, S, D, H = 2, 8, 32, 4
  F = FFN_MULT * D

  key = jax.random.PRNGKey(0)
  kx, kpe, kp = jax.random.split(key, 3)
  x = jax.random.normal(kx, (B, S, D), dtype=jnp.float32)
  x_pe = jax.random.normal(kpe, (B, S, D), dtype=jnp.float32)
  params = make_params(kp, D, F)

  out = detr_encoder_layer(x, x_pe, params, n_heads=H)
  out = jax.block_until_ready(out)

  ref = jax.block_until_ready(reference(x, x_pe, params, n_heads=H))
  assert out.shape == (B, S, D)
  # bf16 MXU operands (f32 accumulation) vs f32 HIGHEST-precision reference.
  assert bool(jnp.allclose(out, ref, atol=2e-2, rtol=2e-2)), "mismatch vs reference"

  print("KERNEL_OK")
</pallas_src>

<mosaic_0001>
module attributes {stable_mosaic.version = 11 : i64} {
  func.func @detr_encoder_layer_kernel(%arg0: i32, %arg1: i32, %arg2: memref<1x8x32xf32, #tpu.memory_space<vmem>>, %arg3: memref<1x8x32xf32, #tpu.memory_space<vmem>>, %arg4: memref<32x64xbf16, #tpu.memory_space<vmem>>, %arg5: memref<1x64xf32, #tpu.memory_space<vmem>>, %arg6: memref<32x32xbf16, #tpu.memory_space<vmem>>, %arg7: memref<1x32xf32, #tpu.memory_space<vmem>>, %arg8: memref<32x32xbf16, #tpu.memory_space<vmem>>, %arg9: memref<1x32xf32, #tpu.memory_space<vmem>>, %arg10: memref<1x32xf32, #tpu.memory_space<vmem>>, %arg11: memref<1x32xf32, #tpu.memory_space<vmem>>, %arg12: memref<32x128xbf16, #tpu.memory_space<vmem>>, %arg13: memref<1x128xf32, #tpu.memory_space<vmem>>, %arg14: memref<128x32xbf16, #tpu.memory_space<vmem>>, %arg15: memref<1x32xf32, #tpu.memory_space<vmem>>, %arg16: memref<1x32xf32, #tpu.memory_space<vmem>>, %arg17: memref<1x32xf32, #tpu.memory_space<vmem>>, %arg18: memref<1x8x32xf32, #tpu.memory_space<vmem>>, %arg19: memref<4x8x8xbf16, #tpu.memory_space<vmem>>, %arg20: memref<4x8x8xbf16, #tpu.memory_space<vmem>>, %arg21: memref<4x8x8xbf16, #tpu.memory_space<vmem>>) attributes {dimension_semantics = [#tpu.dimension_semantics<parallel>, #tpu.dimension_semantics<arbitrary>], iteration_bounds = array<i64: 2, 1>, scalar_prefetch = 0 : i64, scratch_operands = 3 : i64, tpu.core_type = #tpu.core_type<tc>, window_params = [{transform_indices = @transform_0, window_bounds = array<i64: 1, 8, 32>}, {transform_indices = @transform_1, window_bounds = array<i64: 1, 8, 32>}, {pipeline_mode = #tpu.pipeline_mode<synchronous>, transform_indices = @transform_2, window_bounds = array<i64: 32, 64>}, {pipeline_mode = #tpu.pipeline_mode<synchronous>, transform_indices = @transform_3, window_bounds = array<i64: 1, 64>}, {pipeline_mode = #tpu.pipeline_mode<synchronous>, transform_indices = @transform_4, window_bounds = array<i64: 32, 32>}, {pipeline_mode = #tpu.pipeline_mode<synchronous>, transform_indices = @transform_5, window_bounds = array<i64: 1, 32>}, {pipeline_mode = #tpu.pipeline_mode<synchronous>, transform_indices = @transform_6, window_bounds = array<i64: 32, 32>}, {pipeline_mode = #tpu.pipeline_mode<synchronous>, transform_indices = @transform_7, window_bounds = array<i64: 1, 32>}, {pipeline_mode = #tpu.pipeline_mode<synchronous>, transform_indices = @transform_8, window_bounds = array<i64: 1, 32>}, {pipeline_mode = #tpu.pipeline_mode<synchronous>, transform_indices = @transform_9, window_bounds = array<i64: 1, 32>}, {pipeline_mode = #tpu.pipeline_mode<synchronous>, transform_indices = @transform_10, window_bounds = array<i64: 32, 128>}, {pipeline_mode = #tpu.pipeline_mode<synchronous>, transform_indices = @transform_11, window_bounds = array<i64: 1, 128>}, {pipeline_mode = #tpu.pipeline_mode<synchronous>, transform_indices = @transform_12, window_bounds = array<i64: 128, 32>}, {pipeline_mode = #tpu.pipeline_mode<synchronous>, transform_indices = @transform_13, window_bounds = array<i64: 1, 32>}, {pipeline_mode = #tpu.pipeline_mode<synchronous>, transform_indices = @transform_14, window_bounds = array<i64: 1, 32>}, {pipeline_mode = #tpu.pipeline_mode<synchronous>, transform_indices = @transform_15, window_bounds = array<i64: 1, 32>}, {transform_indices = @transform_16, window_bounds = array<i64: 1, 8, 32>}]} {
    %c0_i32 = arith.constant 0 : i32
    %0 = arith.cmpi eq, %arg1, %c0_i32 : i32
    %1 = arith.extui %0 : i1 to i32
    %c0_i32_0 = arith.constant 0 : i32
    %2 = arith.cmpi ne, %1, %c0_i32_0 : i32
    scf.if %2 {
      %c0_50 = arith.constant 0 : index
      %c0_51 = arith.constant 0 : index
      %c0_52 = arith.constant 0 : index
      %104 = vector.load %arg2[%c0_50, %c0_51, %c0_52] : memref<1x8x32xf32, #tpu.memory_space<vmem>>, vector<1x8x32xf32>
      %105 = vector.shape_cast %104 : vector<1x8x32xf32> to vector<8x32xf32>
      %c0_53 = arith.constant 0 : index
      %c0_54 = arith.constant 0 : index
      %c0_55 = arith.constant 0 : index
      %106 = vector.load %arg3[%c0_53, %c0_54, %c0_55] : memref<1x8x32xf32, #tpu.memory_space<vmem>>, vector<1x8x32xf32>
      %107 = vector.shape_cast %106 : vector<1x8x32xf32> to vector<8x32xf32>
      %108 = arith.addf %105, %107 : vector<8x32xf32>
      %109 = arith.truncf %108 : vector<8x32xf32> to vector<8x32xbf16>
      %c0_56 = arith.constant 0 : index
      %c0_57 = arith.constant 0 : index
      %110 = vector.load %arg4[%c0_56, %c0_57] : memref<32x64xbf16, #tpu.memory_space<vmem>>, vector<32x64xbf16>
      %cst_58 = arith.constant dense<0.000000e+00> : vector<8x64xf32>
      %111 = tpu.matmul %109, %110, %cst_58 {dimension_numbers = #tpu.dot_dimension_numbers<[1], [0], [0], [1], [0, 0, 1, 1], [], []>} : vector<8x32xbf16>, vector<32x64xbf16>, vector<8x64xf32> -> vector<8x64xf32>
      %c0_59 = arith.constant 0 : index
      %c0_60 = arith.constant 0 : index
      %112 = vector.load %arg5[%c0_59, %c0_60] : memref<1x64xf32, #tpu.memory_space<vmem>>, vector<1x64xf32>
      %113 = vector.broadcast %112 : vector<1x64xf32> to vector<8x64xf32>
      %114 = arith.addf %111, %113 : vector<8x64xf32>
      %115 = arith.truncf %105 : vector<8x32xf32> to vector<8x32xbf16>
      %c0_61 = arith.constant 0 : index
      %c0_62 = arith.constant 0 : index
      %116 = vector.load %arg6[%c0_61, %c0_62] : memref<32x32xbf16, #tpu.memory_space<vmem>>, vector<32x32xbf16>
      %cst_63 = arith.constant dense<0.000000e+00> : vector<8x32xf32>
      %117 = tpu.matmul %115, %116, %cst_63 {dimension_numbers = #tpu.dot_dimension_numbers<[1], [0], [0], [1], [0, 0, 1, 1], [], []>} : vector<8x32xbf16>, vector<32x32xbf16>, vector<8x32xf32> -> vector<8x32xf32>
      %c0_64 = arith.constant 0 : index
      %c0_65 = arith.constant 0 : index
      %118 = vector.load %arg7[%c0_64, %c0_65] : memref<1x32xf32, #tpu.memory_space<vmem>>, vector<1x32xf32>
      %119 = vector.broadcast %118 : vector<1x32xf32> to vector<8x32xf32>
      %120 = arith.addf %117, %119 : vector<8x32xf32>
      %121 = vector.extract_strided_slice %114 {offsets = [0, 32], sizes = [8, 32], strides = [1, 1]} : vector<8x64xf32> to vector<8x32xf32>
      %122 = tpu.transpose %121, [1, 0] : vector<8x32xf32> -> vector<32x8xf32>
      %123 = vector.shape_cast %122 : vector<32x8xf32> to vector<4x8x8xf32>
      %124 = arith.truncf %123 : vector<4x8x8xf32> to vector<4x8x8xbf16>
      %c0_66 = arith.constant 0 : index
      %c0_67 = arith.constant 0 : index
      %c0_68 = arith.constant 0 : index
      %125 = vector.load %arg20[%c0_66, %c0_67, %c0_68] : memref<4x8x8xbf16, #tpu.memory_space<vmem>>, vector<4x8x8xbf16>
      tpu.vector_store %arg20[%c0_66, %c0_67, %c0_68], %124 {strides = array<i32>} : memref<4x8x8xbf16, #tpu.memory_space<vmem>>, vector<4x8x8xbf16>,
      %126 = vector.extract_strided_slice %114 {offsets = [0, 0], sizes = [8, 8], strides = [1, 1]} : vector<8x64xf32> to vector<8x8xf32>
      %127 = arith.truncf %126 : vector<8x8xf32> to vector<8x8xbf16>
      %c0_69 = arith.constant 0 : index
      %c0_70 = arith.constant 0 : index
      %c0_71 = arith.constant 0 : index
      %128 = vector.load %arg19[%c0_69, %c0_70, %c0_71] : memref<4x8x8xbf16, #tpu.memory_space<vmem>>, vector<1x8x8xbf16>
      %129 = vector.shape_cast %128 : vector<1x8x8xbf16> to vector<8x8xbf16>
      %130 = vector.shape_cast %127 : vector<8x8xbf16> to vector<1x8x8xbf16>
      tpu.vector_store %arg19[%c0_69, %c0_70, %c0_71], %130 {strides = array<i32>} : memref<4x8x8xbf16, #tpu.memory_space<vmem>>, vector<1x8x8xbf16>,
      %131 = vector.extract_strided_slice %120 {offsets = [0, 0], sizes = [8, 8], strides = [1, 1]} : vector<8x32xf32> to vector<8x8xf32>
      %132 = arith.truncf %131 : vector<8x8xf32> to vector<8x8xbf16>
      %c0_72 = arith.constant 0 : index
      %c0_73 = arith.constant 0 : index
      %c0_74 = arith.constant 0 : index
      %133 = vector.load %arg21[%c0_72, %c0_73, %c0_74] : memref<4x8x8xbf16, #tpu.memory_space<vmem>>, vector<1x8x8xbf16>
      %134 = vector.shape_cast %133 : vector<1x8x8xbf16> to vector<8x8xbf16>
      %135 = vector.shape_cast %132 : vector<8x8xbf16> to vector<1x8x8xbf16>
      tpu.vector_store %arg21[%c0_72, %c0_73, %c0_74], %135 {strides = array<i32>} : memref<4x8x8xbf16, #tpu.memory_space<vmem>>, vector<1x8x8xbf16>,
      %136 = vector.extract_strided_slice %114 {offsets = [0, 8], sizes = [8, 8], strides = [1, 1]} : vector<8x64xf32> to vector<8x8xf32>
      %137 = arith.truncf %136 : vector<8x8xf32> to vector<8x8xbf16>
      %c1 = arith.constant 1 : index
      %c0_75 = arith.constant 0 : index
      %c0_76 = arith.constant 0 : index
      %138 = vector.load %arg19[%c1, %c0_75, %c0_76] : memref<4x8x8xbf16, #tpu.memory_space<vmem>>, vector<1x8x8xbf16>
      %139 = vector.shape_cast %138 : vector<1x8x8xbf16> to vector<8x8xbf16>
      %140 = vector.shape_cast %137 : vector<8x8xbf16> to vector<1x8x8xbf16>
      tpu.vector_store %arg19[%c1, %c0_75, %c0_76], %140 {strides = array<i32>} : memref<4x8x8xbf16, #tpu.memory_space<vmem>>, vector<1x8x8xbf16>,
      %141 = vector.extract_strided_slice %120 {offsets = [0, 8], sizes = [8, 8], strides = [1, 1]} : vector<8x32xf32> to vector<8x8xf32>
      %142 = arith.truncf %141 : vector<8x8xf32> to vector<8x8xbf16>
      %c1_77 = arith.constant 1 : index
      %c0_78 = arith.constant 0 : index
      %c0_79 = arith.constant 0 : index
      %143 = vector.load %arg21[%c1_77, %c0_78, %c0_79] : memref<4x8x8xbf16, #tpu.memory_space<vmem>>, vector<1x8x8xbf16>
      %144 = vector.shape_cast %143 : vector<1x8x8xbf16> to vector<8x8xbf16>
      %145 = vector.shape_cast %142 : vector<8x8xbf16> to vector<1x8x8xbf16>
      tpu.vector_store %arg21[%c1_77, %c0_78, %c0_79], %145 {strides = array<i32>} : memref<4x8x8xbf16, #tpu.memory_space<vmem>>, vector<1x8x8xbf16>,
      %146 = vector.extract_strided_slice %114 {offsets = [0, 16], sizes = [8, 8], strides = [1, 1]} : vector<8x64xf32> to vector<8x8xf32>
      %147 = arith.truncf %146 : vector<8x8xf32> to vector<8x8xbf16>
      %c2 = arith.constant 2 : index
      %c0_80 = arith.constant 0 : index
      %c0_81 = arith.constant 0 : index
      %148 = vector.load %arg19[%c2, %c0_80, %c0_81] : memref<4x8x8xbf16, #tpu.memory_space<vmem>>, vector<1x8x8xbf16>
      %149 = vector.shape_cast %148 : vector<1x8x8xbf16> to vector<8x8xbf16>
      %150 = vector.shape_cast %147 : vector<8x8xbf16> to vector<1x8x8xbf16>
      tpu.vector_store %arg19[%c2, %c0_80, %c0_81], %150 {strides = array<i32>} : memref<4x8x8xbf16, #tpu.memory_space<vmem>>, vector<1x8x8xbf16>,
      %151 = vector.extract_strided_slice %120 {offsets = [0, 16], sizes = [8, 8], strides = [1, 1]} : vector<8x32xf32> to vector<8x8xf32>
      %152 = arith.truncf %151 : vector<8x8xf32> to vector<8x8xbf16>
      %c2_82 = arith.constant 2 : index
      %c0_83 = arith.constant 0 : index
      %c0_84 = arith.constant 0 : index
      %153 = vector.load %arg21[%c2_82, %c0_83, %c0_84] : memref<4x8x8xbf16, #tpu.memory_space<vmem>>, vector<1x8x8xbf16>
      %154 = vector.shape_cast %153 : vector<1x8x8xbf16> to vector<8x8xbf16>
      %155 = vector.shape_cast %152 : vector<8x8xbf16> to vector<1x8x8xbf16>
      tpu.vector_store %arg21[%c2_82, %c0_83, %c0_84], %155 {strides = array<i32>} : memref<4x8x8xbf16, #tpu.memory_space<vmem>>, vector<1x8x8xbf16>,
      %156 = vector.extract_strided_slice %114 {offsets = [0, 24], sizes = [8, 8], strides = [1, 1]} : vector<8x64xf32> to vector<8x8xf32>
      %157 = arith.truncf %156 : vector<8x8xf32> to vector<8x8xbf16>
      %c3 = arith.constant 3 : index
      %c0_85 = arith.constant 0 : index
      %c0_86 = arith.constant 0 : index
      %158 = vector.load %arg19[%c3, %c0_85, %c0_86] : memref<4x8x8xbf16, #tpu.memory_space<vmem>>, vector<1x8x8xbf16>
      %159 = vector.shape_cast %158 : vector<1x8x8xbf16> to vector<8x8xbf16>
      %160 = vector.shape_cast %157 : vector<8x8xbf16> to vector<1x8x8xbf16>
      tpu.vector_store %arg19[%c3, %c0_85, %c0_86], %160 {strides = array<i32>} : memref<4x8x8xbf16, #tpu.memory_space<vmem>>, vector<1x8x8xbf16>,
      %161 = vector.extract_strided_slice %120 {offsets = [0, 24], sizes = [8, 8], strides = [1, 1]} : vector<8x32xf32> to vector<8x8xf32>
      %162 = arith.truncf %161 : vector<8x8xf32> to vector<8x8xbf16>
      %c3_87 = arith.constant 3 : index
      %c0_88 = arith.constant 0 : index
      %c0_89 = arith.constant 0 : index
      %163 = vector.load %arg21[%c3_87, %c0_88, %c0_89] : memref<4x8x8xbf16, #tpu.memory_space<vmem>>, vector<1x8x8xbf16>
      %164 = vector.shape_cast %163 : vector<1x8x8xbf16> to vector<8x8xbf16>
      %165 = vector.shape_cast %162 : vector<8x8xbf16> to vector<1x8x8xbf16>
      tpu.vector_store %arg21[%c3_87, %c0_88, %c0_89], %165 {strides = array<i32>} : memref<4x8x8xbf16, #tpu.memory_space<vmem>>, vector<1x8x8xbf16>,
    } else {
    }
    %c8_i32 = arith.constant 8 : i32
    %3 = arith.muli %arg1, %c8_i32 : i32
    %4 = tpu.assume_multiple %3, 8 : i32
    %c0 = arith.constant 0 : index
    %5 = arith.index_cast %4 : i32 to index
    %c0_1 = arith.constant 0 : index
    %6 = vector.load %arg19[%c0, %5, %c0_1] : memref<4x8x8xbf16, #tpu.memory_space<vmem>>, vector<4x8x8xbf16>
    %c0_2 = arith.constant 0 : index
    %c0_3 = arith.constant 0 : index
    %c0_4 = arith.constant 0 : index
    %7 = vector.load %arg20[%c0_2, %c0_3, %c0_4] : memref<4x8x8xbf16, #tpu.memory_space<vmem>>, vector<4x8x8xbf16>
    "tpu.trace_start"() <{level = 10 : i32, message = "hqd,hdk->hqk"}> : () -> ()
    %cst = arith.constant dense<0.000000e+00> : vector<4x8x8xf32>
    %8 = tpu.matmul %6, %7, %cst {dimension_numbers = #tpu.dot_dimension_numbers<[2], [1], [1], [2], [0, 0, 0, 1, 1, 2], [0], [0]>} : vector<4x8x8xbf16>, vector<4x8x8xbf16>, vector<4x8x8xf32> -> vector<4x8x8xf32>
    "tpu.trace_stop"() : () -> ()
    %cst_5 = arith.constant dense<0xFF800000> : vector<4x8xf32>
    %9 = vector.multi_reduction <maximumf>, %8, %cst_5 [2] : vector<4x8x8xf32> to vector<4x8xf32>
    %10 = vector.shape_cast %9 : vector<4x8xf32> to vector<4x8x1xf32>
    %11 = vector.broadcast %10 : vector<4x8x1xf32> to vector<4x8x8xf32>
    %12 = arith.subf %8, %11 : vector<4x8x8xf32>
    %13 = math.exp %12 : vector<4x8x8xf32>
    %cst_6 = arith.constant dense<0.000000e+00> : vector<4x8xf32>
    %14 = vector.multi_reduction <add>, %13, %cst_6 [2] : vector<4x8x8xf32> to vector<4x8xf32>
    %15 = vector.shape_cast %14 : vector<4x8xf32> to vector<4x8x1xf32>
    %16 = arith.truncf %13 : vector<4x8x8xf32> to vector<4x8x8xbf16>
    %c0_7 = arith.constant 0 : index
    %c0_8 = arith.constant 0 : index
    %c0_9 = arith.constant 0 : index
    %17 = vector.load %arg21[%c0_7, %c0_8, %c0_9] : memref<4x8x8xbf16, #tpu.memory_space<vmem>>, vector<4x8x8xbf16>
    "tpu.trace_start"() <{level = 10 : i32, message = "hqk,hkd->hqd"}> : () -> ()
    %cst_10 = arith.constant dense<0.000000e+00> : vector<4x8x8xf32>
    %18 = tpu.matmul %16, %17, %cst_10 {dimension_numbers = #tpu.dot_dimension_numbers<[2], [1], [1], [2], [0, 0, 0, 1, 1, 2], [0], [0]>} : vector<4x8x8xbf16>, vector<4x8x8xbf16>, vector<4x8x8xf32> -> vector<4x8x8xf32>
    "tpu.trace_stop"() : () -> ()
    %19 = tpu.reciprocal %15 {approx = true} : vector<4x8x1xf32> -> vector<4x8x1xf32>
    %20 = vector.broadcast %19 : vector<4x8x1xf32> to vector<4x8x8xf32>
    %21 = arith.mulf %18, %20 : vector<4x8x8xf32>
    %22 = tpu.transpose %21, [1, 0, 2] : vector<4x8x8xf32> -> vector<8x4x8xf32>
    %23 = vector.shape_cast %22 : vector<8x4x8xf32> to vector<8x32xf32>
    %24 = arith.truncf %23 : vector<8x32xf32> to vector<8x32xbf16>
    %c0_11 = arith.constant 0 : index
    %c0_12 = arith.constant 0 : index
    %25 = vector.load %arg8[%c0_11, %c0_12] : memref<32x32xbf16, #tpu.memory_space<vmem>>, vector<32x32xbf16>
    %cst_13 = arith.constant dense<0.000000e+00> : vector<8x32xf32>
    %26 = tpu.matmul %24, %25, %cst_13 {dimension_numbers = #tpu.dot_dimension_numbers<[1], [0], [0], [1], [0, 0, 1, 1], [], []>} : vector<8x32xbf16>, vector<32x32xbf16>, vector<8x32xf32> -> vector<8x32xf32>
    %c0_14 = arith.constant 0 : index
    %c0_15 = arith.constant 0 : index
    %27 = vector.load %arg9[%c0_14, %c0_15] : memref<1x32xf32, #tpu.memory_space<vmem>>, vector<1x32xf32>
    %28 = vector.broadcast %27 : vector<1x32xf32> to vector<8x32xf32>
    %29 = arith.addf %26, %28 : vector<8x32xf32>
    %c0_16 = arith.constant 0 : index
    %30 = arith.index_cast %4 : i32 to index
    %c0_17 = arith.constant 0 : index
    %31 = vector.load %arg2[%c0_16, %30, %c0_17] : memref<1x8x32xf32, #tpu.memory_space<vmem>>, vector<1x8x32xf32>
    %32 = vector.shape_cast %31 : vector<1x8x32xf32> to vector<8x32xf32>
    %33 = arith.addf %32, %29 : vector<8x32xf32>
    %c0_18 = arith.constant 0 : index
    %c0_19 = arith.constant 0 : index
    %34 = vector.load %arg10[%c0_18, %c0_19] : memref<1x32xf32, #tpu.memory_space<vmem>>, vector<1x32xf32>
    %c0_20 = arith.constant 0 : index
    %c0_21 = arith.constant 0 : index
    %35 = vector.load %arg11[%c0_20, %c0_21] : memref<1x32xf32, #tpu.memory_space<vmem>>, vector<1x32xf32>
    %cst_22 = arith.constant dense<0.000000e+00> : vector<8xf32>
    %36 = vector.multi_reduction <add>, %33, %cst_22 [1] : vector<8x32xf32> to vector<8xf32>
    %37 = vector.shape_cast %36 : vector<8xf32> to vector<8x1xf32>
    %cst_23 = arith.constant 3.200000e+01 : f32
    %38 = vector.broadcast %cst_23 : f32 to vector<8x1xf32>
    %39 = arith.divf %37, %38 : vector<8x1xf32>
    %40 = vector.broadcast %39 : vector<8x1xf32> to vector<8x32xf32>
    %41 = arith.subf %33, %40 : vector<8x32xf32>
    %42 = vector.broadcast %39 : vector<8x1xf32> to vector<8x32xf32>
    %43 = arith.subf %33, %42 : vector<8x32xf32>
    %44 = arith.mulf %41, %43 : vector<8x32xf32>
    %cst_24 = arith.constant dense<0.000000e+00> : vector<8xf32>
    %45 = vector.multi_reduction <add>, %44, %cst_24 [1] : vector<8x32xf32> to vector<8xf32>
    %46 = vector.shape_cast %45 : vector<8xf32> to vector<8x1xf32>
    %cst_25 = arith.constant 3.200000e+01 : f32
    %47 = vector.broadcast %cst_25 : f32 to vector<8x1xf32>
    %48 = arith.divf %46, %47 : vector<8x1xf32>
    %49 = vector.broadcast %39 : vector<8x1xf32> to vector<8x32xf32>
    %50 = arith.subf %33, %49 : vector<8x32xf32>
    %cst_26 = arith.constant 9.99999974E-6 : f32
    %51 = vector.broadcast %cst_26 : f32 to vector<8x1xf32>
    %52 = arith.addf %48, %51 : vector<8x1xf32>
    %53 = math.rsqrt %52 : vector<8x1xf32>
    %54 = vector.broadcast %53 : vector<8x1xf32> to vector<8x32xf32>
    %55 = arith.mulf %50, %54 : vector<8x32xf32>
    %56 = vector.broadcast %34 : vector<1x32xf32> to vector<8x32xf32>
    %57 = arith.mulf %55, %56 : vector<8x32xf32>
    %58 = vector.broadcast %35 : vector<1x32xf32> to vector<8x32xf32>
    %59 = arith.addf %57, %58 : vector<8x32xf32>
    %60 = arith.truncf %59 : vector<8x32xf32> to vector<8x32xbf16>
    %c0_27 = arith.constant 0 : index
    %c0_28 = arith.constant 0 : index
    %61 = vector.load %arg12[%c0_27, %c0_28] : memref<32x128xbf16, #tpu.memory_space<vmem>>, vector<32x128xbf16>
    %cst_29 = arith.constant dense<0.000000e+00> : vector<8x128xf32>
    %62 = tpu.matmul %60, %61, %cst_29 {dimension_numbers = #tpu.dot_dimension_numbers<[1], [0], [0], [1], [0, 0, 1, 1], [], []>} : vector<8x32xbf16>, vector<32x128xbf16>, vector<8x128xf32> -> vector<8x128xf32>
    %c0_30 = arith.constant 0 : index
    %c0_31 = arith.constant 0 : index
    %63 = vector.load %arg13[%c0_30, %c0_31] : memref<1x128xf32, #tpu.memory_space<vmem>>, vector<1x128xf32>
    %64 = vector.broadcast %63 : vector<1x128xf32> to vector<8x128xf32>
    %65 = arith.addf %62, %64 : vector<8x128xf32>
    %cst_32 = arith.constant 0.000000e+00 : f32
    %66 = vector.broadcast %cst_32 : f32 to vector<8x128xf32>
    %67 = arith.maximumf %65, %66 : vector<8x128xf32>
    %68 = arith.truncf %67 : vector<8x128xf32> to vector<8x128xbf16>
    %c0_33 = arith.constant 0 : index
    %c0_34 = arith.constant 0 : index
    %69 = vector.load %arg14[%c0_33, %c0_34] : memref<128x32xbf16, #tpu.memory_space<vmem>>, vector<128x32xbf16>
    %cst_35 = arith.constant dense<0.000000e+00> : vector<8x32xf32>
    %70 = tpu.matmul %68, %69, %cst_35 {dimension_numbers = #tpu.dot_dimension_numbers<[1], [0], [0], [1], [0, 0, 1, 1], [], []>} : vector<8x128xbf16>, vector<128x32xbf16>, vector<8x32xf32> -> vector<8x32xf32>
    %c0_36 = arith.constant 0 : index
    %c0_37 = arith.constant 0 : index
    %71 = vector.load %arg15[%c0_36, %c0_37] : memref<1x32xf32, #tpu.memory_space<vmem>>, vector<1x32xf32>
    %72 = vector.broadcast %71 : vector<1x32xf32> to vector<8x32xf32>
    %73 = arith.addf %70, %72 : vector<8x32xf32>
    %74 = arith.addf %59, %73 : vector<8x32xf32>
    %c0_38 = arith.constant 0 : index
    %c0_39 = arith.constant 0 : index
    %75 = vector.load %arg16[%c0_38, %c0_39] : memref<1x32xf32, #tpu.memory_space<vmem>>, vector<1x32xf32>
    %c0_40 = arith.constant 0 : index
    %c0_41 = arith.constant 0 : index
    %76 = vector.load %arg17[%c0_40, %c0_41] : memref<1x32xf32, #tpu.memory_space<vmem>>, vector<1x32xf32>
    %cst_42 = arith.constant dense<0.000000e+00> : vector<8xf32>
    %77 = vector.multi_reduction <add>, %74, %cst_42 [1] : vector<8x32xf32> to vector<8xf32>
    %78 = vector.shape_cast %77 : vector<8xf32> to vector<8x1xf32>
    %cst_43 = arith.constant 3.200000e+01 : f32
    %79 = vector.broadcast %cst_43 : f32 to vector<8x1xf32>
    %80 = arith.divf %78, %79 : vector<8x1xf32>
    %81 = vector.broadcast %80 : vector<8x1xf32> to vector<8x32xf32>
    %82 = arith.subf %74, %81 : vector<8x32xf32>
    %83 = vector.broadcast %80 : vector<8x1xf32> to vector<8x32xf32>
    %84 = arith.subf %74, %83 : vector<8x32xf32>
    %85 = arith.mulf %82, %84 : vector<8x32xf32>
    %cst_44 = arith.constant dense<0.000000e+00> : vector<8xf32>
    %86 = vector.multi_reduction <add>, %85, %cst_44 [1] : vector<8x32xf32> to vector<8xf32>
    %87 = vector.shape_cast %86 : vector<8xf32> to vector<8x1xf32>
    %cst_45 = arith.constant 3.200000e+01 : f32
    %88 = vector.broadcast %cst_45 : f32 to vector<8x1xf32>
    %89 = arith.divf %87, %88 : vector<8x1xf32>
    %90 = vector.broadcast %80 : vector<8x1xf32> to vector<8x32xf32>
    %91 = arith.subf %74, %90 : vector<8x32xf32>
    %cst_46 = arith.constant 9.99999974E-6 : f32
    %92 = vector.broadcast %cst_46 : f32 to vector<8x1xf32>
    %93 = arith.addf %89, %92 : vector<8x1xf32>
    %94 = math.rsqrt %93 : vector<8x1xf32>
    %95 = vector.broadcast %94 : vector<8x1xf32> to vector<8x32xf32>
    %96 = arith.mulf %91, %95 : vector<8x32xf32>
    %97 = vector.broadcast %75 : vector<1x32xf32> to vector<8x32xf32>
    %98 = arith.mulf %96, %97 : vector<8x32xf32>
    %99 = vector.broadcast %76 : vector<1x32xf32> to vector<8x32xf32>
    %100 = arith.addf %98, %99 : vector<8x32xf32>
    %c0_47 = arith.constant 0 : index
    %c0_48 = arith.constant 0 : index
    %c0_49 = arith.constant 0 : index
    %101 = vector.load %arg18[%c0_47, %c0_48, %c0_49] : memref<1x8x32xf32, #tpu.memory_space<vmem>>, vector<1x8x32xf32>
    %102 = vector.shape_cast %101 : vector<1x8x32xf32> to vector<8x32xf32>
    %103 = vector.shape_cast %100 : vector<8x32xf32> to vector<1x8x32xf32>
    tpu.vector_store %arg18[%c0_47, %c0_48, %c0_49], %103 {strides = array<i32>} : memref<1x8x32xf32, #tpu.memory_space<vmem>>, vector<1x8x32xf32>,
    return
  }
  func.func @transform_0(%arg0: i32, %arg1: i32) -> (i32, i32, i32) {
    %c0_i32 = arith.constant 0 : i32
    %c0_i32_0 = arith.constant 0 : i32
    %c0_i32_1 = arith.constant 0 : i32
    return %arg0, %c0_i32, %c0_i32_0 : i32, i32, i32
  }
  func.func @transform_1(%arg0: i32, %arg1: i32) -> (i32, i32, i32) {
    %c0_i32 = arith.constant 0 : i32
    %c0_i32_0 = arith.constant 0 : i32
    %c0_i32_1 = arith.constant 0 : i32
    return %arg0, %c0_i32, %c0_i32_0 : i32, i32, i32
  }
  func.func @transform_2(%arg0: i32, %arg1: i32) -> (i32, i32) {
    %c0_i32 = arith.constant 0 : i32
    %c0_i32_0 = arith.constant 0 : i32
    %c0_i32_1 = arith.constant 0 : i32
    return %c0_i32, %c0_i32_0 : i32, i32
  }
  func.func @transform_3(%arg0: i32, %arg1: i32) -> (i32, i32) {
    %c0_i32 = arith.constant 0 : i32
    %c0_i32_0 = arith.constant 0 : i32
    %c0_i32_1 = arith.constant 0 : i32
    return %c0_i32, %c0_i32_0 : i32, i32
  }
  func.func @transform_4(%arg0: i32, %arg1: i32) -> (i32, i32) {
    %c0_i32 = arith.constant 0 : i32
    %c0_i32_0 = arith.constant 0 : i32
    %c0_i32_1 = arith.constant 0 : i32
    return %c0_i32, %c0_i32_0 : i32, i32
  }
  func.func @transform_5(%arg0: i32, %arg1: i32) -> (i32, i32) {
    %c0_i32 = arith.constant 0 : i32
    %c0_i32_0 = arith.constant 0 : i32
    %c0_i32_1 = arith.constant 0 : i32
    return %c0_i32, %c0_i32_0 : i32, i32
  }
  func.func @transform_6(%arg0: i32, %arg1: i32) -> (i32, i32) {
    %c0_i32 = arith.constant 0 : i32
    %c0_i32_0 = arith.constant 0 : i32
    %c0_i32_1 = arith.constant 0 : i32
    return %c0_i32, %c0_i32_0 : i32, i32
  }
  func.func @transform_7(%arg0: i32, %arg1: i32) -> (i32, i32) {
    %c0_i32 = arith.constant 0 : i32
    %c0_i32_0 = arith.constant 0 : i32
    %c0_i32_1 = arith.constant 0 : i32
    return %c0_i32, %c0_i32_0 : i32, i32
  }
  func.func @transform_8(%arg0: i32, %arg1: i32) -> (i32, i32) {
    %c0_i32 = arith.constant 0 : i32
    %c0_i32_0 = arith.constant 0 : i32
    %c0_i32_1 = arith.constant 0 : i32
    return %c0_i32, %c0_i32_0 : i32, i32
  }
  func.func @transform_9(%arg0: i32, %arg1: i32) -> (i32, i32) {
    %c0_i32 = arith.constant 0 : i32
    %c0_i32_0 = arith.constant 0 : i32
    %c0_i32_1 = arith.constant 0 : i32
    return %c0_i32, %c0_i32_0 : i32, i32
  }
  func.func @transform_10(%arg0: i32, %arg1: i32) -> (i32, i32) {
    %c0_i32 = arith.constant 0 : i32
    %c0_i32_0 = arith.constant 0 : i32
    %c0_i32_1 = arith.constant 0 : i32
    return %c0_i32, %c0_i32_0 : i32, i32
  }
  func.func @transform_11(%arg0: i32, %arg1: i32) -> (i32, i32) {
    %c0_i32 = arith.constant 0 : i32
    %c0_i32_0 = arith.constant 0 : i32
    %c0_i32_1 = arith.constant 0 : i32
    return %c0_i32, %c0_i32_0 : i32, i32
  }
  func.func @transform_12(%arg0: i32, %arg1: i32) -> (i32, i32) {
    %c0_i32 = arith.constant 0 : i32
    %c0_i32_0 = arith.constant 0 : i32
    %c0_i32_1 = arith.constant 0 : i32
    return %c0_i32, %c0_i32_0 : i32, i32
  }
  func.func @transform_13(%arg0: i32, %arg1: i32) -> (i32, i32) {
    %c0_i32 = arith.constant 0 : i32
    %c0_i32_0 = arith.constant 0 : i32
    %c0_i32_1 = arith.constant 0 : i32
    return %c0_i32, %c0_i32_0 : i32, i32
  }
  func.func @transform_14(%arg0: i32, %arg1: i32) -> (i32, i32) {
    %c0_i32 = arith.constant 0 : i32
    %c0_i32_0 = arith.constant 0 : i32
    %c0_i32_1 = arith.constant 0 : i32
    return %c0_i32, %c0_i32_0 : i32, i32
  }
  func.func @transform_15(%arg0: i32, %arg1: i32) -> (i32, i32) {
    %c0_i32 = arith.constant 0 : i32
    %c0_i32_0 = arith.constant 0 : i32
    %c0_i32_1 = arith.constant 0 : i32
    return %c0_i32, %c0_i32_0 : i32, i32
  }
  func.func @transform_16(%arg0: i32, %arg1: i32) -> (i32, i32, i32) {
    %c0_i32 = arith.constant 0 : i32
    %c0_i32_0 = arith.constant 0 : i32
    return %arg0, %arg1, %c0_i32 : i32, i32, i32
  }
}

</mosaic_0001>

<llo_original>
// kernel: tpu_custom_call.1
$region0: #{tpu_custom_call.1}
  #allocation0 [shape = 'u32[]', space=smem, size = 0x4, offset = 0x4, fixed_abs, tag = 'smem constant byte address 0x4 - core index']
  #allocation1 [shape = 'u32[144,128]{1,0:T(1,128)}', space=vmem, size = 0x12000, scoped, tag = 'internal scratch']
  #allocation2 [shape = 'bf16[4,8,8]{2,1,0:T(8,128)(2,1)}', space=vmem, size = 0x2000, scoped, tag = 'scratch operand']
  #allocation3 [shape = 'bf16[4,8,8]{2,1,0:T(8,128)(2,1)}', space=vmem, size = 0x2000, scoped, tag = 'scratch operand']
  #allocation4 [shape = 'bf16[4,8,8]{2,1,0:T(8,128)(2,1)}', space=vmem, size = 0x2000, scoped, tag = 'scratch operand']
  %s0 = inlined_call_operand.vmem [shape: f32[2,8,32], index: 0, kind: input, shape index: {}]
  %s1 = inlined_call_operand.vmem [shape: f32[2,8,32], index: 1, kind: input, shape index: {}]
  %s2 = inlined_call_operand.vmem [shape: bf16[32,64], index: 2, kind: input, shape index: {}]
  %s3 = inlined_call_operand.vmem [shape: f32[1,64], index: 3, kind: input, shape index: {}]
  %s4 = inlined_call_operand.vmem [shape: bf16[32,32], index: 4, kind: input, shape index: {}]
  %s5 = inlined_call_operand.vmem [shape: f32[1,32], index: 5, kind: input, shape index: {}]
  %s6 = inlined_call_operand.vmem [shape: bf16[32,32], index: 6, kind: input, shape index: {}]
  %s7 = inlined_call_operand.hbm [shape: f32[1,32], index: 7, kind: input, shape index: {}]
  %s8 = inlined_call_operand.hbm [shape: f32[1,32], index: 8, kind: input, shape index: {}]
  %s9 = inlined_call_operand.hbm [shape: f32[1,32], index: 9, kind: input, shape index: {}]
  %s10 = inlined_call_operand.vmem [shape: bf16[32,128], index: 10, kind: input, shape index: {}]
  %s11 = inlined_call_operand.vmem [shape: f32[1,128], index: 11, kind: input, shape index: {}]
  %s12 = inlined_call_operand.vmem [shape: bf16[128,32], index: 12, kind: input, shape index: {}]
  %s13 = inlined_call_operand.vmem [shape: f32[1,32], index: 13, kind: input, shape index: {}]
  %s14 = inlined_call_operand.vmem [shape: f32[1,32], index: 14, kind: input, shape index: {}]
  %s15 = inlined_call_operand.vmem [shape: f32[1,32], index: 15, kind: input, shape index: {}]
  %s16 = inlined_call_operand.hbm [shape: f32[2,8,32], index: 16, kind: output, shape index: {}]
  %s17 = sld [smem:[#allocation0]]
  $region113: #{tpu_custom_call.1} parent=0
    _
  %s19 = ssub.s32 1, %s17
  %s20 = scalar_select 0, %s19, %s17
  $region1: #{tpu_custom_call.1} parent=0
    #allocation5 [shape = 'u8[512]{0}', space=vmem, size = 0x400, scoped, tag = 'input window, operand 7, single buffered']
    #allocation6 [shape = 's32[2]{0}', space=sflag, size = 0x8, scoped, tag = 'scoped memory for tpu_custom_call.1']
    #allocation7 [shape = 's32[2]{0}', space=sflag, size = 0x8, scoped, tag = 'scoped memory for tpu_custom_call.1']
    #allocation8 [shape = 'u8[512]{0}', space=vmem, size = 0x400, scoped, tag = 'input window, operand 8, single buffered']
    #allocation9 [shape = 's32[1]{0}', space=sflag, size = 0x4, scoped, tag = 'scoped memory for tpu_custom_call.1']
    #allocation10 [shape = 'u8[512]{0}', space=vmem, size = 0x400, scoped, tag = 'input window, operand 9, single buffered']
    #allocation11 [shape = 'u8[8192]{0}', space=vmem, size = 0x2000, scoped, tag = 'output window, operand 0']
    %21 = vsyncpa [#allocation6], 0
    %22 = vsyncpa [#allocation9], 0
    %23 = vsyncpa [#allocation7], 0
    %s24 = scalar_lea.sflag [#allocation7], 1
    %25 = vsyncpa %s24, 0
    loop: start=0, step=1, limit=4
    $region2: #{tpu_custom_call.1} parent=1 // loop_pre_header
      _
    $region3: #{tpu_custom_call.1} parent=1 // loop_header
      %s27 = sphi 0, %s31
      %p28 = scmp.ge.s32.totalorder %s27, 4
      %s34 = sphi 0, %s46
      %s35 = sphi 0, %s42
      %s36 = sphi 0, %s34
      %s37 = sphi 0, %s35
      %s38 = sphi 0, %s36
      %s39 = sphi 0, %s37
      %s49 = sphi 0, %s51
      %s52 = sphi 0, %s49
      %s53 = sphi 0, %s52
      %s69 = sphi 0, %s53
      %s75 = sphi 0, %s77
      %s78 = sphi 0, %s75
      %s79 = sphi 0, %s78
      %s95 = sphi 0, %s79
      %s99 = sphi 0, %s99
      %s101 = sphi 0, %s99
      %s102 = sphi 0, %s101
      %s116 = sphi 0, %s102
      %s120 = sphi 0, %s120
      %s122 = sphi 0, %s120
      %s123 = sphi 0, %s122
      %s137 = sphi 0, %s123
      %s141 = sphi 0, %s141
      %s143 = sphi 0, %s141
      %s144 = sphi 0, %s143
      %s158 = sphi 0, %s144
      %s162 = sphi 0, %s162
      %s164 = sphi 0, %s162
      %s165 = sphi 0, %s164
      %s179 = sphi 0, %s165
      %s183 = sphi 0, %s183
      %s185 = sphi 0, %s183
      %s186 = sphi 0, %s185
      %s200 = sphi 0, %s186
      %s204 = sphi 0, %s204
      %s206 = sphi 0, %s204
      %s207 = sphi 0, %s206
      %s221 = sphi 0, %s207
      %s225 = sphi 0, %s225
      %s227 = sphi 0, %s225
      %s228 = sphi 0, %s227
      %s242 = sphi 0, %s228
      %s246 = sphi 0, %s246
      %s248 = sphi 0, %s246
      %s249 = sphi 0, %s248
      %s263 = sphi 0, %s249
      %s267 = sphi 0, %s267
      %s269 = sphi 0, %s267
      %s270 = sphi 0, %s269
      %s284 = sphi 0, %s270
      %s288 = sphi 0, %s288
      %s290 = sphi 0, %s288
      %s291 = sphi 0, %s290
      %s305 = sphi 0, %s291
      %s309 = sphi 0, %s309
      %s311 = sphi 0, %s309
      %s312 = sphi 0, %s311
      %s326 = sphi 0, %s312
      %s330 = sphi 0, %s330
      %s332 = sphi 0, %s330
      %s333 = sphi 0, %s332
      %s347 = sphi 0, %s333
      %s351 = sphi 0, %s351
      %s353 = sphi 0, %s351
      %s354 = sphi 0, %s353
      %s368 = sphi 0, %s354
      %s372 = sphi 0, %s372
      %s374 = sphi 0, %s372
      %s375 = sphi 0, %s374
      %s389 = sphi 0, %s375
      %s397 = sphi 0, %s399
      %s400 = sphi 0, %s397
      %s401 = sphi 0, %s400
      %s417 = sphi 0, %s401
    $region4: #{tpu_custom_call.1} parent=1 // loop_header_branch
      %30 = sbr.rel (%p28) target = $region8
    $region5: #{tpu_custom_call.1} parent=1 // loop_body
      %s32 = ssub.s32 %s27, 1
      %s33 = ssub.s32 %s27, 2
      %s40 = sadd.s32 1, %s35
      %p41 = scmp.ge.s32.totalorder %s40, 1
      %s42 = scalar_select %p41, 0, %s40
      %s43 = sadd.s32 1, %s34
      %s44 = scalar_select %p41, %s43, %s34
      %p45 = scmp.ge.s32.totalorder %s44, 2
      %s46 = scalar_select %p45, 0, %s44
      %s47 = ssub.s32 %s34, %s46
      %p48 = scmp.eq.s32.totalorder %s47, 0
      %s50 = sadd.s32 %s49, 1
      %s51 = scalar_select %p48, %s49, %s50
      %p54 = pneg %p48
      %p55 = scmp.eq.s32.totalorder %s27, 1
      %p56 = por %p54, %p55
      %p57 = scmp.ne.s32.totalorder %s49, %s52
      %p58 = scmp.eq.s32.totalorder %s27, 0
      %p59 = por %p57, %p58
      %p60 = scmp.ne.s32.totalorder %s49, %s52
      %p61 = scmp.eq.s32.totalorder %s32, 1
      %p62 = por %p60, %p61
      %p63 = scmp.ne.s32.totalorder %s52, %s53
      %p64 = scmp.eq.s32.totalorder %s32, 0
      %p65 = por %p63, %p64
      %p66 = scmp.ne.s32.totalorder %s52, %s53
      %p67 = scmp.eq.s32.totalorder %s33, 1
      %p68 = por %p66, %p67
      %p70 = scmp.ne.s32.totalorder %s53, %s69
      %p71 = scmp.eq.s32.totalorder %s33, 0
      %p72 = por %p70, %p71
      %s73 = ssub.s32 %s34, %s46
      %p74 = scmp.eq.s32.totalorder %s73, 0
      %s76 = sadd.s32 %s75, 1
      %s77 = scalar_select %p74, %s75, %s76
      %p80 = pneg %p74
      %p81 = scmp.eq.s32.totalorder %s27, 1
      %p82 = por %p80, %p81
      %p83 = scmp.ne.s32.totalorder %s75, %s78
      %p84 = scmp.eq.s32.totalorder %s27, 0
      %p85 = por %p83, %p84
      %p86 = scmp.ne.s32.totalorder %s75, %s78
      %p87 = scmp.eq.s32.totalorder %s32, 1
      %p88 = por %p86, %p87
      %p89 = scmp.ne.s32.totalorder %s78, %s79
      %p90 = scmp.eq.s32.totalorder %s32, 0
      %p91 = por %p89, %p90
      %p92 = scmp.ne.s32.totalorder %s78, %s79
      %p93 = scmp.eq.s32.totalorder %s33, 1
      %p94 = por %p92, %p93
      %p96 = scmp.ne.s32.totalorder %s79, %s95
      %p97 = scmp.eq.s32.totalorder %s33, 0
      %p98 = por %p96, %p97
      %s100 = sadd.s32 %s99, 1
      %p103 = scmp.eq.s32.totalorder %s27, 1
      %p104 = scmp.ne.s32.totalorder %s99, %s101
      %p105 = scmp.eq.s32.totalorder %s27, 0
      %p106 = por %p104, %p105
      %p107 = scmp.ne.s32.totalorder %s99, %s101
      %p108 = scmp.eq.s32.totalorder %s32, 1
      %p109 = por %p107, %p108
      %p110 = scmp.ne.s32.totalorder %s101, %s102
      %p111 = scmp.eq.s32.totalorder %s32, 0
      %p112 = por %p110, %p111
      %p113 = scmp.ne.s32.totalorder %s101, %s102
      %p114 = scmp.eq.s32.totalorder %s33, 1
      %p115 = por %p113, %p114
      %p117 = scmp.ne.s32.totalorder %s102, %s116
      %p118 = scmp.eq.s32.totalorder %s33, 0
      %p119 = por %p117, %p118
      %s121 = sadd.s32 %s120, 1
      %p124 = scmp.eq.s32.totalorder %s27, 1
      %p125 = scmp.ne.s32.totalorder %s120, %s122
      %p126 = scmp.eq.s32.totalorder %s27, 0
      %p127 = por %p125, %p126
      %p128 = scmp.ne.s32.totalorder %s120, %s122
      %p129 = scmp.eq.s32.totalorder %s32, 1
      %p130 = por %p128, %p129
      %p131 = scmp.ne.s32.totalorder %s122, %s123
      %p132 = scmp.eq.s32.totalorder %s32, 0
      %p133 = por %p131, %p132
      %p134 = scmp.ne.s32.totalorder %s122, %s123
      %p135 = scmp.eq.s32.totalorder %s33, 1
      %p136 = por %p134, %p135
      %p138 = scmp.ne.s32.totalorder %s123, %s137
      %p139 = scmp.eq.s32.totalorder %s33, 0
      %p140 = por %p138, %p139
      %s142 = sadd.s32 %s141, 1
      %p145 = scmp.eq.s32.totalorder %s27, 1
      %p146 = scmp.ne.s32.totalorder %s141, %s143
      %p147 = scmp.eq.s32.totalorder %s27, 0
      %p148 = por %p146, %p147
      %p149 = scmp.ne.s32.totalorder %s141, %s143
      %p150 = scmp.eq.s32.totalorder %s32, 1
      %p151 = por %p149, %p150
      %p152 = scmp.ne.s32.totalorder %s143, %s144
      %p153 = scmp.eq.s32.totalorder %s32, 0
      %p154 = por %p152, %p153
      %p155 = scmp.ne.s32.totalorder %s143, %s144
      %p156 = scmp.eq.s32.totalorder %s33, 1
      %p157 = por %p155, %p156
      %p159 = scmp.ne.s32.totalorder %s144, %s158
      %p160 = scmp.eq.s32.totalorder %s33, 0
      %p161 = por %p159, %p160
      %s163 = sadd.s32 %s162, 1
      %p166 = scmp.eq.s32.totalorder %s27, 1
      %p167 = scmp.ne.s32.totalorder %s162, %s164
      %p168 = scmp.eq.s32.totalorder %s27, 0
      %p169 = por %p167, %p168
      %p170 = scmp.ne.s32.totalorder %s162, %s164
      %p171 = scmp.eq.s32.totalorder %s32, 1
      %p172 = por %p170, %p171
      %p173 = scmp.ne.s32.totalorder %s164, %s165
      %p174 = scmp.eq.s32.totalorder %s32, 0
      %p175 = por %p173, %p174
      %p176 = scmp.ne.s32.totalorder %s164, %s165
      %p177 = scmp.eq.s32.totalorder %s33, 1
      %p178 = por %p176, %p177
      %p180 = scmp.ne.s32.totalorder %s165, %s179
      %p181 = scmp.eq.s32.totalorder %s33, 0
      %p182 = por %p180, %p181
      %s184 = sadd.s32 %s183, 1
      %p187 = scmp.eq.s32.totalorder %s27, 1
      %p188 = scmp.ne.s32.totalorder %s183, %s185
      %p189 = scmp.eq.s32.totalorder %s27, 0
      %p190 = por %p188, %p189
      %p191 = scmp.ne.s32.totalorder %s183, %s185
      %p192 = scmp.eq.s32.totalorder %s32, 1
      %p193 = por %p191, %p192
      %p194 = scmp.ne.s32.totalorder %s185, %s186
      %p195 = scmp.eq.s32.totalorder %s32, 0
      %p196 = por %p194, %p195
      %p197 = scmp.ne.s32.totalorder %s185, %s186
      %p198 = scmp.eq.s32.totalorder %s33, 1
      %p199 = por %p197, %p198
      %p201 = scmp.ne.s32.totalorder %s186, %s200
      %p202 = scmp.eq.s32.totalorder %s33, 0
      %p203 = por %p201, %p202
      %s205 = sadd.s32 %s204, 1
      %p208 = scmp.eq.s32.totalorder %s27, 1
      %p209 = scmp.ne.s32.totalorder %s204, %s206
      %p210 = scmp.eq.s32.totalorder %s27, 0
      %p211 = por %p209, %p210
      %p212 = scmp.ne.s32.totalorder %s204, %s206
      %p213 = scmp.eq.s32.totalorder %s32, 1
      %p214 = por %p212, %p213
      %p215 = scmp.ne.s32.totalorder %s206, %s207
      %p216 = scmp.eq.s32.totalorder %s32, 0
      %p217 = por %p215, %p216
      %p218 = scmp.ne.s32.totalorder %s206, %s207
      %p219 = scmp.eq.s32.totalorder %s33, 1
      %p220 = por %p218, %p219
      %p222 = scmp.ne.s32.totalorder %s207, %s221
      %p223 = scmp.eq.s32.totalorder %s33, 0
      %p224 = por %p222, %p223
      %s226 = sadd.s32 %s225, 1
      %p229 = scmp.eq.s32.totalorder %s27, 1
      %p230 = scmp.ne.s32.totalorder %s225, %s227
      %p231 = scmp.eq.s32.totalorder %s27, 0
      %p232 = por %p230, %p231
      %p233 = scmp.ne.s32.totalorder %s225, %s227
      %p234 = scmp.eq.s32.totalorder %s32, 1
      %p235 = por %p233, %p234
      %p236 = scmp.ne.s32.totalorder %s227, %s228
      %p237 = scmp.eq.s32.totalorder %s32, 0
      %p238 = por %p236, %p237
      %p239 = scmp.ne.s32.totalorder %s227, %s228
      %p240 = scmp.eq.s32.totalorder %s33, 1
      %p241 = por %p239, %p240
      %p243 = scmp.ne.s32.totalorder %s228, %s242
      %p244 = scmp.eq.s32.totalorder %s33, 0
      %p245 = por %p243, %p244
      %s247 = sadd.s32 %s246, 1
      %p250 = scmp.eq.s32.totalorder %s27, 1
      %p251 = scmp.ne.s32.totalorder %s246, %s248
      %p252 = scmp.eq.s32.totalorder %s27, 0
      %p253 = por %p251, %p252
      %p254 = scmp.ne.s32.totalorder %s246, %s248
      %p255 = scmp.eq.s32.totalorder %s32, 1
      %p256 = por %p254, %p255
      %p257 = scmp.ne.s32.totalorder %s248, %s249
      %p258 = scmp.eq.s32.totalorder %s32, 0
      %p259 = por %p257, %p258
      %p260 = scmp.ne.s32.totalorder %s248, %s249
      %p261 = scmp.eq.s32.totalorder %s33, 1
      %p262 = por %p260, %p261
      %p264 = scmp.ne.s32.totalorder %s249, %s263
      %p265 = scmp.eq.s32.totalorder %s33, 0
      %p266 = por %p264, %p265
      %s268 = sadd.s32 %s267, 1
      %p271 = scmp.eq.s32.totalorder %s27, 1
      %p272 = scmp.ne.s32.totalorder %s267, %s269
      %p273 = scmp.eq.s32.totalorder %s27, 0
      %p274 = por %p272, %p273
      %p275 = scmp.ne.s32.totalorder %s267, %s269
      %p276 = scmp.eq.s32.totalorder %s32, 1
      %p277 = por %p275, %p276
      %p278 = scmp.ne.s32.totalorder %s269, %s270
      %p279 = scmp.eq.s32.totalorder %s32, 0
      %p280 = por %p278, %p279
      %p281 = scmp.ne.s32.totalorder %s269, %s270
      %p282 = scmp.eq.s32.totalorder %s33, 1
      %p283 = por %p281, %p282
      %p285 = scmp.ne.s32.totalorder %s270, %s284
      %p286 = scmp.eq.s32.totalorder %s33, 0
      %p287 = por %p285, %p286
      %s289 = sadd.s32 %s288, 1
      %p292 = scmp.eq.s32.totalorder %s27, 1
      %p293 = scmp.ne.s32.totalorder %s288, %s290
      %p294 = scmp.eq.s32.totalorder %s27, 0
      %p295 = por %p293, %p294
      %p296 = scmp.ne.s32.totalorder %s288, %s290
      %p297 = scmp.eq.s32.totalorder %s32, 1
      %p298 = por %p296, %p297
      %p299 = scmp.ne.s32.totalorder %s290, %s291
      %p300 = scmp.eq.s32.totalorder %s32, 0
      %p301 = por %p299, %p300
      %p302 = scmp.ne.s32.totalorder %s290, %s291
      %p303 = scmp.eq.s32.totalorder %s33, 1
      %p304 = por %p302, %p303
      %p306 = scmp.ne.s32.totalorder %s291, %s305
      %p307 = scmp.eq.s32.totalorder %s33, 0
      %p308 = por %p306, %p307
      %s310 = sadd.s32 %s309, 1
      %p313 = scmp.eq.s32.totalorder %s27, 1
      %p314 = scmp.ne.s32.totalorder %s309, %s311
      %p315 = scmp.eq.s32.totalorder %s27, 0
      %p316 = por %p314, %p315
      %p317 = scmp.ne.s32.totalorder %s309, %s311
      %p318 = scmp.eq.s32.totalorder %s32, 1
      %p319 = por %p317, %p318
      %p320 = scmp.ne.s32.totalorder %s311, %s312
      %p321 = scmp.eq.s32.totalorder %s32, 0
      %p322 = por %p320, %p321
      %p323 = scmp.ne.s32.totalorder %s311, %s312
      %p324 = scmp.eq.s32.totalorder %s33, 1
      %p325 = por %p323, %p324
      %p327 = scmp.ne.s32.totalorder %s312, %s326
      %p328 = scmp.eq.s32.totalorder %s33, 0
      %p329 = por %p327, %p328
      %s331 = sadd.s32 %s330, 1
      %p334 = scmp.eq.s32.totalorder %s27, 1
      %p335 = scmp.ne.s32.totalorder %s330, %s332
      %p336 = scmp.eq.s32.totalorder %s27, 0
      %p337 = por %p335, %p336
      %p338 = scmp.ne.s32.totalorder %s330, %s332
      %p339 = scmp.eq.s32.totalorder %s32, 1
      %p340 = por %p338, %p339
      %p341 = scmp.ne.s32.totalorder %s332, %s333
      %p342 = scmp.eq.s32.totalorder %s32, 0
      %p343 = por %p341, %p342
      %p344 = scmp.ne.s32.totalorder %s332, %s333
      %p345 = scmp.eq.s32.totalorder %s33, 1
      %p346 = por %p344, %p345
      %p348 = scmp.ne.s32.totalorder %s333, %s347
      %p349 = scmp.eq.s32.totalorder %s33, 0
      %p350 = por %p348, %p349
      %s352 = sadd.s32 %s351, 1
      %p355 = scmp.eq.s32.totalorder %s27, 1
      %p356 = scmp.ne.s32.totalorder %s351, %s353
      %p357 = scmp.eq.s32.totalorder %s27, 0
      %p358 = por %p356, %p357
      %p359 = scmp.ne.s32.totalorder %s351, %s353
      %p360 = scmp.eq.s32.totalorder %s32, 1
      %p361 = por %p359, %p360
      %p362 = scmp.ne.s32.totalorder %s353, %s354
      %p363 = scmp.eq.s32.totalorder %s32, 0
      %p364 = por %p362, %p363
      %p365 = scmp.ne.s32.totalorder %s353, %s354
      %p366 = scmp.eq.s32.totalorder %s33, 1
      %p367 = por %p365, %p366
      %p369 = scmp.ne.s32.totalorder %s354, %s368
      %p370 = scmp.eq.s32.totalorder %s33, 0
      %p371 = por %p369, %p370
      %s373 = sadd.s32 %s372, 1
      %p376 = scmp.eq.s32.totalorder %s27, 1
      %p377 = scmp.ne.s32.totalorder %s372, %s374
      %p378 = scmp.eq.s32.totalorder %s27, 0
      %p379 = por %p377, %p378
      %p380 = scmp.ne.s32.totalorder %s372, %s374
      %p381 = scmp.eq.s32.totalorder %s32, 1
      %p382 = por %p380, %p381
      %p383 = scmp.ne.s32.totalorder %s374, %s375
      %p384 = scmp.eq.s32.totalorder %s32, 0
      %p385 = por %p383, %p384
      %p386 = scmp.ne.s32.totalorder %s374, %s375
      %p387 = scmp.eq.s32.totalorder %s33, 1
      %p388 = por %p386, %p387
      %p390 = scmp.ne.s32.totalorder %s375, %s389
      %p391 = scmp.eq.s32.totalorder %s33, 0
      %p392 = por %p390, %p391
      %s393 = ssub.s32 %s34, %s46
      %s394 = ssub.s32 %s35, %s42
      %s395 = sor.u32 %s393, %s394
      %p396 = scmp.eq.s32.totalorder %s395, 0
      %s398 = sadd.s32 %s397, 1
      %s399 = scalar_select %p396, %s397, %s398
      %p402 = pneg %p396
      %p403 = scmp.eq.s32.totalorder %s27, 1
      %p404 = por %p402, %p403
      %p405 = scmp.ne.s32.totalorder %s397, %s400
      %p406 = scmp.eq.s32.totalorder %s27, 0
      %p407 = por %p405, %p406
      %p408 = scmp.ne.s32.totalorder %s397, %s400
      %p409 = scmp.eq.s32.totalorder %s32, 1
      %p410 = por %p408, %p409
      %p411 = scmp.ne.s32.totalorder %s400, %s401
      %p412 = scmp.eq.s32.totalorder %s32, 0
      %p413 = por %p411, %p412
      %p414 = scmp.ne.s32.totalorder %s400, %s401
      %p415 = scmp.eq.s32.totalorder %s33, 1
      %p416 = por %p414, %p415
      %p418 = scmp.ne.s32.totalorder %s401, %s417
      %p419 = scmp.eq.s32.totalorder %s33, 0
      %p420 = por %p418, %p419
      %p421 = scmp.le.s32.totalorder 1, %s27
      %p422 = scmp.lt.s32.totalorder %s27, 3
      %p423 = pnand %p421, %p422
      %p424 = pneg %p423
      // Predicated region
      $region9: #{tpu_custom_call.1} parent=5 // pred_check
        _
      $region10: #{tpu_custom_call.1} parent=5 // pred_check_branch
        %426 = sbr.rel (%p423) target = $region12
      $region11: #{tpu_custom_call.1} parent=5 // pred_region
        %s427 = ssub.s32 %s27, 1
        // Predicated region
        $region13: #{tpu_custom_call.1} parent=11 // pred_check
          %p428 = pneg %p112
        $region14: #{tpu_custom_call.1} parent=11 // pred_check_branch
          %430 = sbr.rel (%p428) target = $region16
        $region15: #{tpu_custom_call.1} parent=11 // pred_region
          _
        $region16: #{tpu_custom_call.1} parent=11 // pred_fallthru
          _
        // Predicated region
        $region17: #{tpu_custom_call.1} parent=11 // pred_check
          %p431 = pneg %p133
        $region18: #{tpu_custom_call.1} parent=11 // pred_check_branch
          %433 = sbr.rel (%p431) target = $region20
        $region19: #{tpu_custom_call.1} parent=11 // pred_region
          _
        $region20: #{tpu_custom_call.1} parent=11 // pred_fallthru
          _
        // Predicated region
        $region21: #{tpu_custom_call.1} parent=11 // pred_check
          %p434 = pneg %p154
        $region22: #{tpu_custom_call.1} parent=11 // pred_check_branch
          %436 = sbr.rel (%p434) target = $region24
        $region23: #{tpu_custom_call.1} parent=11 // pred_region
          _
        $region24: #{tpu_custom_call.1} parent=11 // pred_fallthru
          _
        // Predicated region
        $region25: #{tpu_custom_call.1} parent=11 // pred_check
          %p437 = pneg %p175
        $region26: #{tpu_custom_call.1} parent=11 // pred_check_branch
          %439 = sbr.rel (%p437) target = $region28
        $region27: #{tpu_custom_call.1} parent=11 // pred_region
          _
        $region28: #{tpu_custom_call.1} parent=11 // pred_fallthru
          _
        // Predicated region
        $region29: #{tpu_custom_call.1} parent=11 // pred_check
          %p440 = pneg %p196
        $region30: #{tpu_custom_call.1} parent=11 // pred_check_branch
          %442 = sbr.rel (%p440) target = $region32
        $region31: #{tpu_custom_call.1} parent=11 // pred_region
          _
        $region32: #{tpu_custom_call.1} parent=11 // pred_fallthru
          _
        // Predicated region
        $region33: #{tpu_custom_call.1} parent=11 // pred_check
          %p443 = pneg %p217
        $region34: #{tpu_custom_call.1} parent=11 // pred_check_branch
          %445 = sbr.rel (%p443) target = $region36
        $region35: #{tpu_custom_call.1} parent=11 // pred_region
          %s447 = ssub.s32 16, 16
          %448 = vsyncadd [#allocation6], %s447
          %s450 = sshll.u32 [#allocation5], 4
          %s451 = int_to_ptr.vmem [resolvable:$true] %s450
          %453 = dma.hbm_to_vmem [thread:$0]  %s7, 16, %s451, [#allocation6]
        $region36: #{tpu_custom_call.1} parent=11 // pred_fallthru
          _
        // Predicated region
        $region37: #{tpu_custom_call.1} parent=11 // pred_check
          %p454 = pneg %p238
        $region38: #{tpu_custom_call.1} parent=11 // pred_check_branch
          %456 = sbr.rel (%p454) target = $region40
        $region39: #{tpu_custom_call.1} parent=11 // pred_region
          %s458 = ssub.s32 16, 16
          %459 = vsyncadd [#allocation9], %s458
          %s461 = sshll.u32 [#allocation8], 4
          %s462 = int_to_ptr.vmem [resolvable:$true] %s461
          %464 = dma.hbm_to_vmem [thread:$0]  %s8, 16, %s462, [#allocation9]
        $region40: #{tpu_custom_call.1} parent=11 // pred_fallthru
          _
        // Predicated region
        $region41: #{tpu_custom_call.1} parent=11 // pred_check
          %p465 = pneg %p259
        $region42: #{tpu_custom_call.1} parent=11 // pred_check_branch
          %467 = sbr.rel (%p465) target = $region44
        $region43: #{tpu_custom_call.1} parent=11 // pred_region
          %s469 = ssub.s32 16, 16
          %470 = vsyncadd [#allocation9], %s469
          %s472 = sshll.u32 [#allocation10], 4
          %s473 = int_to_ptr.vmem [resolvable:$true] %s472
          %475 = dma.hbm_to_vmem [thread:$0]  %s9, 16, %s473, [#allocation9]
        $region44: #{tpu_custom_call.1} parent=11 // pred_fallthru
          _
        // Predicated region
        $region45: #{tpu_custom_call.1} parent=11 // pred_check
          %p476 = pneg %p280
        $region46: #{tpu_custom_call.1} parent=11 // pred_check_branch
          %478 = sbr.rel (%p476) target = $region48
        $region47: #{tpu_custom_call.1} parent=11 // pred_region
          _
        $region48: #{tpu_custom_call.1} parent=11 // pred_fallthru
          _
        // Predicated region
        $region49: #{tpu_custom_call.1} parent=11 // pred_check
          %p479 = pneg %p301
        $region50: #{tpu_custom_call.1} parent=11 // pred_check_branch
          %481 = sbr.rel (%p479) target = $region52
        $region51: #{tpu_custom_call.1} parent=11 // pred_region
          _
        $region52: #{tpu_custom_call.1} parent=11 // pred_fallthru
          _
        // Predicated region
        $region53: #{tpu_custom_call.1} parent=11 // pred_check
          %p482 = pneg %p322
        $region54: #{tpu_custom_call.1} parent=11 // pred_check_branch
          %484 = sbr.rel (%p482) target = $region56
        $region55: #{tpu_custom_call.1} parent=11 // pred_region
          _
        $region56: #{tpu_custom_call.1} parent=11 // pred_fallthru
          _
        // Predicated region
        $region57: #{tpu_custom_call.1} parent=11 // pred_check
          %p485 = pneg %p343
        $region58: #{tpu_custom_call.1} parent=11 // pred_check_branch
          %487 = sbr.rel (%p485) target = $region60
        $region59: #{tpu_custom_call.1} parent=11 // pred_region
          _
        $region60: #{tpu_custom_call.1} parent=11 // pred_fallthru
          _
        // Predicated region
        $region61: #{tpu_custom_call.1} parent=11 // pred_check
          %p488 = pneg %p364
        $region62: #{tpu_custom_call.1} parent=11 // pred_check_branch
          %490 = sbr.rel (%p488) target = $region64
        $region63: #{tpu_custom_call.1} parent=11 // pred_region
          _
        $region64: #{tpu_custom_call.1} parent=11 // pred_fallthru
          _
        // Predicated region
        $region65: #{tpu_custom_call.1} parent=11 // pred_check
          %p491 = pneg %p385
        $region66: #{tpu_custom_call.1} parent=11 // pred_check_branch
          %493 = sbr.rel (%p491) target = $region68
        $region67: #{tpu_custom_call.1} parent=11 // pred_region
          _
        $region68: #{tpu_custom_call.1} parent=11 // pred_fallthru
          _
      $region12: #{tpu_custom_call.1} parent=5 // pred_fallthru
        _
      %p494 = scmp.lt.s32.totalorder %s27, 2
      // Predicated region
      $region69: #{tpu_custom_call.1} parent=5 // pred_check
        %p495 = pneg %p494
      $region70: #{tpu_custom_call.1} parent=5 // pred_check_branch
        %497 = sbr.rel (%p495) target = $region72
      $region71: #{tpu_custom_call.1} parent=5 // pred_region
        // Predicated region
        $region73: #{tpu_custom_call.1} parent=71 // pred_check
          %p498 = pneg %p59
        $region74: #{tpu_custom_call.1} parent=71 // pred_check_branch
          %500 = sbr.rel (%p498) target = $region76
        $region75: #{tpu_custom_call.1} parent=71 // pred_region
          %p501 = scmp.lt.s32.totalorder %s34, 1
          %s502 = scalar_select %p501, %s34, 1
          %s503 = smul.addr %s502, 8
          %s504 = scalar_lea.vmem %s0, %s503
        $region76: #{tpu_custom_call.1} parent=71 // pred_fallthru
          _
        // Predicated region
        $region77: #{tpu_custom_call.1} parent=71 // pred_check
          %p505 = pneg %p85
        $region78: #{tpu_custom_call.1} parent=71 // pred_check_branch
          %507 = sbr.rel (%p505) target = $region80
        $region79: #{tpu_custom_call.1} parent=71 // pred_region
          %p508 = scmp.lt.s32.totalorder %s34, 1
          %s509 = scalar_select %p508, %s34, 1
          %s510 = smul.addr %s509, 8
          %s511 = scalar_lea.vmem %s1, %s510
        $region80: #{tpu_custom_call.1} parent=71 // pred_fallthru
          _
      $region72: #{tpu_custom_call.1} parent=5 // pred_fallthru
        _
      %p512 = scmp.le.s32.totalorder 1, %s27
      %p513 = scmp.lt.s32.totalorder %s27, 3
      %p514 = pnand %p512, %p513
      %p515 = pneg %p514
      // Predicated region
      $region81: #{tpu_custom_call.1} parent=5 // pred_check
        _
      $region82: #{tpu_custom_call.1} parent=5 // pred_check_branch
        %517 = sbr.rel (%p514) target = $region84
      $region83: #{tpu_custom_call.1} parent=5 // pred_region
        %s518 = ssub.s32 %s27, 1
        // Predicated region
        $region85: #{tpu_custom_call.1} parent=83 // pred_check
          %p519 = pneg %p217
        $region86: #{tpu_custom_call.1} parent=83 // pred_check_branch
          %521 = sbr.rel (%p519) target = $region88
        $region87: #{tpu_custom_call.1} parent=83 // pred_region
          %522 = dma.done [#allocation6], 16
        $region88: #{tpu_custom_call.1} parent=83 // pred_fallthru
          _
        // Predicated region
        $region89: #{tpu_custom_call.1} parent=83 // pred_check
          %p523 = pneg %p238
        $region90: #{tpu_custom_call.1} parent=83 // pred_check_branch
          %525 = sbr.rel (%p523) target = $region92
        $region91: #{tpu_custom_call.1} parent=83 // pred_region
          %526 = dma.done [#allocation9], 16
        $region92: #{tpu_custom_call.1} parent=83 // pred_fallthru
          _
        // Predicated region
        $region93: #{tpu_custom_call.1} parent=83 // pred_check
          %p527 = pneg %p259
        $region94: #{tpu_custom_call.1} parent=83 // pred_check_branch
          %529 = sbr.rel (%p527) target = $region96
        $region95: #{tpu_custom_call.1} parent=83 // pred_region
          %530 = dma.done [#allocation9], 16
        $region96: #{tpu_custom_call.1} parent=83 // pred_fallthru
          _
        %p531 = scmp.lt.s32.totalorder %s36, 1
        %s532 = scalar_select %p531, %s36, 1
        %s533 = smul.addr %s532, 8
        %s534 = scalar_lea.vmem %s0, %s533
        %p535 = pneg %p65
        %p536 = pneg %p62
        %p537 = scmp.lt.s32.totalorder %s36, 1
        %s538 = scalar_select %p537, %s36, 1
        %s539 = smul.addr %s538, 8
        %s540 = scalar_lea.vmem %s1, %s539
        %p541 = pneg %p91
        %p542 = pneg %p88
        %p543 = pneg %p112
        %p544 = pneg %p109
        %p545 = pneg %p133
        %p546 = pneg %p130
        %p547 = pneg %p154
        %p548 = pneg %p151
        %p549 = pneg %p175
        %p550 = pneg %p172
        %p551 = pneg %p196
        %p552 = pneg %p193
        %p553 = pneg %p217
        %p554 = pneg %p214
        %p555 = pneg %p238
        %p556 = pneg %p235
        %p557 = pneg %p259
        %p558 = pneg %p256
        %p559 = pneg %p280
        %p560 = pneg %p277
        %p561 = pneg %p301
        %p562 = pneg %p298
        %p563 = pneg %p322
        %p564 = pneg %p319
        %p565 = pneg %p343
        %p566 = pneg %p340
        %p567 = pneg %p364
        %p568 = pneg %p361
        %p569 = pneg %p385
        %p570 = pneg %p382
        %p571 = pneg %p413
        %p572 = pneg %p410
        %s573 = sand.u32 %s400, 1
        %s574 = scalar_lea.sflag [#allocation7], %s573
        %s575 = sand.u32 %s400, 1
        %s576 = smul.addr %s575, 8
        %s577 = scalar_lea.vmem [#allocation11], %s576
        %p578 = scmp.lt.s32.totalorder %s36, 1
        %s579 = scalar_select %p578, %s36, 1
        %s580 = smul.addr %s579, 8
        %s581 = scalar_lea.vmem %s0, %s580
        %p582 = scmp.lt.s32.totalorder %s36, 1
        %s583 = scalar_select %p582, %s36, 1
        %s584 = smul.addr %s583, 8
        %s585 = scalar_lea.vmem %s1, %s584
        %p587 = scmp.eq.s32.totalorder %s37, 0
        // Predicated region
        $region97: #{tpu_custom_call.1} parent=83 // pred_check
          %p588 = pneg %p587
        $region98: #{tpu_custom_call.1} parent=83 // pred_check_branch
          %590 = sbr.rel (%p588) target = $region100
        $region99: #{tpu_custom_call.1} parent=83 // pred_region
          %v591 = vld [vmem:[%s581] sm:$0xff]
          %v592 = vld [vmem:[%s585] sm:$0xff]
          %v593 = vadd.f32 %v591, %v592
          %v594 = vpack.c.bf16 %v593, %v593
          %v595 = vld [vmem:[%s2] sm:$0xf]
          %v596 = vld [vmem:[%s2 + $0x4] sm:$0xf]
          %v597 = vld [vmem:[%s2 + $0x8] sm:$0xf]
          %v598 = vld [vmem:[%s2 + $0xc] sm:$0xf]
          %v599 = vld [vmem:[%s3] sm:$0x1]
          %v601 = vlaneseq
          %v602 = vshrl.u32 %v601, 7
          %v603 = vsub.s32 0, %v602
          %v604 = vrot.slane %v599, %v603
          %v610 = vunpack.c.l.b16 %v595
          %v611 = vunpack.c.l.b16 %v596
          %v612 = vunpack.c.l.b16 %v597
          %v613 = vunpack.c.l.b16 %v598
          %v614 = vpack.c.b16 %v611, %v610
          %v615 = vpack.c.b16 %v613, %v612
          %vm618 = vcmask 261120
          %v620 = vsel %vm618, %v594, 0
          %622 = vmatprep.subr.bf16.mxu0 0
          %623 = vmatpush1.bf16.msra.mxu0 %v614
          %624 = vmatprep.subr.bf16.mxu0 0
          %625 = vmatpush1.bf16.msra.mxu0 %v615
          %626 = vmatprep.subr.bf16.mxu0 0
          %627 = vmatpush1.bf16.msra.mxu0 0
          %628 = vmatprep.subr.bf16.mxu0 0
          %629 = vmatpush1.bf16.msra.mxu0 0
          %630 = vmatprep.subr.bf16.mxu0 0
          %631 = vmatpush1.bf16.msra.mxu0 0
          %632 = vmatprep.subr.bf16.mxu0 0
          %633 = vmatpush1.bf16.msra.mxu0 0
          %634 = vmatprep.subr.bf16.mxu0 0
          %635 = vmatpush1.bf16.msra.mxu0 0
          %636 = vmatprep.subr.bf16.mxu0 0
          %637 = vmatpush1.bf16.msra.mxu0 0
          %638 = vmatprep.subr.bf16.mxu0 0
          %639 = vmatpush1.bf16.msra.mxu0 0
          %640 = vmatprep.subr.bf16.mxu0 0
          %641 = vmatpush1.bf16.msra.mxu0 0
          %642 = vmatprep.subr.bf16.mxu0 0
          %643 = vmatpush1.bf16.msra.mxu0 0
          %644 = vmatprep.subr.bf16.mxu0 0
          %645 = vmatpush1.bf16.msra.mxu0 0
          %646 = vmatprep.subr.bf16.mxu0 0
          %647 = vmatpush1.bf16.msra.mxu0 0
          %648 = vmatprep.subr.bf16.mxu0 0
          %649 = vmatpush1.bf16.msra.mxu0 0
          %650 = vmatprep.subr.bf16.mxu0 0
          %651 = vmatpush1.bf16.msra.mxu0 0
          %652 = vmatprep.subr.bf16.mxu0 0
          %653 = vmatpush1.bf16.msra.mxu0 0
          %654 = vmatprep.mubr.bf16.mxu0 0
          %655 = vmatmul.mubr.bf16.gmra.mrb[0].mxu0 %v620
          %v656 = vpop.f32.mrb[0].mxu0
          %v657 = vadd.f32 %v604, %v656
          %v658 = vpop.f32.mrb[0].mxu0
          %v659 = vpop.f32.mrb[0].mxu0
          %v660 = vpop.f32.mrb[0].mxu0
          %661 = vdwg.mxu0
          %v662 = vpack.c.bf16 %v591, %v591
          %v663 = vld [vmem:[%s4] sm:$0xf]
          %v664 = vld [vmem:[%s4 + $0x4] sm:$0xf]
          %v665 = vld [vmem:[%s4 + $0x8] sm:$0xf]
          %v666 = vld [vmem:[%s4 + $0xc] sm:$0xf]
          %v667 = vld [vmem:[%s5] sm:$0x1]
          %v669 = vlaneseq
          %v670 = vshrl.u32 %v669, 7
          %v671 = vsub.s32 0, %v670
          %v672 = vrot.slane %v667, %v671
          %v678 = vunpack.c.l.b16 %v663
          %v679 = vunpack.c.l.b16 %v664
          %v680 = vunpack.c.l.b16 %v665
          %v681 = vunpack.c.l.b16 %v666
          %v682 = vpack.c.b16 %v679, %v678
          %v683 = vpack.c.b16 %v681, %v680
          %v687 = vsel %vm618, %v662, 0
          %689 = vmatprep.subr.bf16.mxu0 0
          %690 = vmatpush1.bf16.msra.mxu0 %v682
          %691 = vmatprep.subr.bf16.mxu0 0
          %692 = vmatpush1.bf16.msra.mxu0 %v683
          %693 = vmatprep.subr.bf16.mxu0 0
          %694 = vmatpush1.bf16.msra.mxu0 0
          %695 = vmatprep.subr.bf16.mxu0 0
          %696 = vmatpush1.bf16.msra.mxu0 0
          %697 = vmatprep.subr.bf16.mxu0 0
          %698 = vmatpush1.bf16.msra.mxu0 0
          %699 = vmatprep.subr.bf16.mxu0 0
          %700 = vmatpush1.bf16.msra.mxu0 0
          %701 = vmatprep.subr.bf16.mxu0 0
          %702 = vmatpush1.bf16.msra.mxu0 0
          %703 = vmatprep.subr.bf16.mxu0 0
          %704 = vmatpush1.bf16.msra.mxu0 0
          %705 = vmatprep.subr.bf16.mxu0 0
          %706 = vmatpush1.bf16.msra.mxu0 0
          %707 = vmatprep.subr.bf16.mxu0 0
          %708 = vmatpush1.bf16.msra.mxu0 0
          %709 = vmatprep.subr.bf16.mxu0 0
          %710 = vmatpush1.bf16.msra.mxu0 0
          %711 = vmatprep.subr.bf16.mxu0 0
          %712 = vmatpush1.bf16.msra.mxu0 0
          %713 = vmatprep.subr.bf16.mxu0 0
          %714 = vmatpush1.bf16.msra.mxu0 0
          %715 = vmatprep.subr.bf16.mxu0 0
          %716 = vmatpush1.bf16.msra.mxu0 0
          %717 = vmatprep.subr.bf16.mxu0 0
          %718 = vmatpush1.bf16.msra.mxu0 0
          %719 = vmatprep.subr.bf16.mxu0 0
          %720 = vmatpush1.bf16.msra.mxu0 0
          %721 = vmatprep.mubr.bf16.mxu0 0
          %722 = vmatmul.mubr.bf16.gmra.mrb[0].mxu0 %v687
          %v723 = vpop.f32.mrb[0].mxu0
          %v724 = vadd.f32 %v672, %v723
          %v725 = vpop.f32.mrb[0].mxu0
          %v726 = vpop.f32.mrb[0].mxu0
          %v727 = vpop.f32.mrb[0].mxu0
          %728 = vdwg.mxu0
          %730 = vrot.lane.b32.xlu0 %v657, 96
          %v731 = vpop.permute.xlu0 %730
          %733 = vxpose.xlu0.b32.start [1/16] %v731, 128
          %734 = vxpose.xlu0.b32.cont [2/16] 0.0, 128
          %735 = vxpose.xlu0.b32.cont [3/16] 0.0, 128
          %736 = vxpose.xlu0.b32.cont [4/16] 0.0, 128
          %737 = vxpose.xlu0.b32.cont [5/16] 0.0, 128
          %738 = vxpose.xlu0.b32.cont [6/16] 0.0, 128
          %739 = vxpose.xlu0.b32.cont [7/16] 0.0, 128
          %740 = vxpose.xlu0.b32.cont [8/16] 0.0, 128
          %741 = vxpose.xlu0.b32.cont [9/16] 0.0, 128
          %742 = vxpose.xlu0.b32.cont [10/16] 0.0, 128
          %743 = vxpose.xlu0.b32.cont [11/16] 0.0, 128
          %744 = vxpose.xlu0.b32.cont [12/16] 0.0, 128
          %745 = vxpose.xlu0.b32.cont [13/16] 0.0, 128
          %746 = vxpose.xlu0.b32.cont [14/16] 0.0, 128
          %747 = vxpose.xlu0.b32.cont [15/16] 0.0, 128
          %748 = vxpose.xlu0.b32.end [16/16] 0.0, 128
          %v749 = vpop.trf.xlu0
          %v750 = vpop.trf.xlu0
          %v751 = vpop.trf.xlu0
          %v752 = vpop.trf.xlu0
          %v753 = vpop.trf.xlu0
          %v754 = vpop.trf.xlu0
          %v755 = vpop.trf.xlu0
          %v756 = vpop.trf.xlu0
          %v757 = vpop.trf.xlu0
          %v758 = vpop.trf.xlu0
          %v759 = vpop.trf.xlu0
          %v760 = vpop.trf.xlu0
          %v761 = vpop.trf.xlu0
          %v762 = vpop.trf.xlu0
          %v763 = vpop.trf.xlu0
          %v764 = vpop.trf.xlu0
          %v765 = vpack.c.bf16 %v749, %v749
          %v766 = vpack.c.bf16 %v750, %v750
          %v767 = vpack.c.bf16 %v751, %v751
          %v768 = vpack.c.bf16 %v752, %v752
          %vm769 = vcmask 60416
          %770 = vst.msk [vmem:[#allocation3] sm:$0xf] %vm769, %v765
          %771 = vst.msk [vmem:[#allocation3 + $0x4] sm:$0xf] %vm769, %v766
          %772 = vst.msk [vmem:[#allocation3 + $0x8] sm:$0xf] %vm769, %v767
          %773 = vst.msk [vmem:[#allocation3 + $0xc] sm:$0xf] %vm769, %v768
          %v774 = vpack.c.bf16 %v657, %v657
          %775 = vst.msk [vmem:[#allocation2] sm:$0xf] %vm769, %v774
          %v776 = vpack.c.bf16 %v724, %v724
          %777 = vst.msk [vmem:[#allocation4] sm:$0xf] %vm769, %v776
          %v779 = vunpack.c.l.b16 %v774
          %v780 = vpack.c.b16 %v779, %v779
          %781 = vrot.lane.b32.xlu0 %v780, 120
          %v782 = vpop.permute.xlu0 %781
          %s784 = scalar_lea.vmem [#allocation2], 4
          %785 = vst.msk [vmem:[%s784] sm:$0xf] %vm769, %v782
          %v787 = vunpack.c.l.b16 %v776
          %v788 = vpack.c.b16 %v787, %v787
          %789 = vrot.lane.b32.xlu0 %v788, 120
          %v790 = vpop.permute.xlu0 %789
          %s792 = scalar_lea.vmem [#allocation4], 4
          %793 = vst.msk [vmem:[%s792] sm:$0xf] %vm769, %v790
          %794 = vrot.lane.b32.xlu0 %v780, 112
          %v795 = vpop.permute.xlu0 %794
          %s797 = scalar_lea.vmem [#allocation2], 8
          %798 = vst.msk [vmem:[%s797] sm:$0xf] %vm769, %v795
          %799 = vrot.lane.b32.xlu0 %v788, 112
          %v800 = vpop.permute.xlu0 %799
          %s802 = scalar_lea.vmem [#allocation4], 8
          %803 = vst.msk [vmem:[%s802] sm:$0xf] %vm769, %v800
          %804 = vrot.lane.b32.xlu0 %v780, 104
          %v805 = vpop.permute.xlu0 %804
          %s807 = scalar_lea.vmem [#allocation2], 12
          %808 = vst.msk [vmem:[%s807] sm:$0xf] %vm769, %v805
          %809 = vrot.lane.b32.xlu0 %v788, 104
          %v810 = vpop.permute.xlu0 %809
          %s812 = scalar_lea.vmem [#allocation4], 12
          %813 = vst.msk [vmem:[%s812] sm:$0xf] %vm769, %v810
        $region100: #{tpu_custom_call.1} parent=83 // pred_fallthru
          _
        %s814 = smul.u32 %s37, 8
        %s815 = sshra.s32 %s814, 3
        %s816 = sand.u32 %s814, 7
        %s817 = smul.addr %s815, 4
        %s818 = scalar_lea.vmem [#allocation2], %s817
        %v819 = vld [vmem:[%s818] sm:$0xf]
        %v820 = vld [vmem:[%s818 + $0x4] sm:$0xf]
        %v821 = vld [vmem:[%s818 + $0x8] sm:$0xf]
        %v822 = vld [vmem:[%s818 + $0xc] sm:$0xf]
        %v823 = vld [vmem:[#allocation3] sm:$0xf]
        %v824 = vld [vmem:[#allocation3 + $0x4] sm:$0xf]
        %v825 = vld [vmem:[#allocation3 + $0x8] sm:$0xf]
        %v826 = vld [vmem:[#allocation3 + $0xc] sm:$0xf]
        %vm827 = vcmask 64512
        %v829 = vsel %vm827, %v819, 0
        %vm831 = vcmask 1043456
        %v833 = vsel %vm831, %v823, 0
        %835 = vmatprep.subr.bf16.mxu0 0
        %836 = vmatpush1.bf16.msra.mxu0 %v833
        %837 = vmatprep.subr.bf16.mxu0 0
        %838 = vmatpush1.bf16.msra.mxu0 0
        %839 = vmatprep.subr.bf16.mxu0 0
        %840 = vmatpush1.bf16.msra.mxu0 0
        %841 = vmatprep.subr.bf16.mxu0 0
        %842 = vmatpush1.bf16.msra.mxu0 0
        %843 = vmatprep.subr.bf16.mxu0 0
        %844 = vmatpush1.bf16.msra.mxu0 0
        %845 = vmatprep.subr.bf16.mxu0 0
        %846 = vmatpush1.bf16.msra.mxu0 0
        %847 = vmatprep.subr.bf16.mxu0 0
        %848 = vmatpush1.bf16.msra.mxu0 0
        %849 = vmatprep.subr.bf16.mxu0 0
        %850 = vmatpush1.bf16.msra.mxu0 0
        %851 = vmatprep.subr.bf16.mxu0 0
        %852 = vmatpush1.bf16.msra.mxu0 0
        %853 = vmatprep.subr.bf16.mxu0 0
        %854 = vmatpush1.bf16.msra.mxu0 0
        %855 = vmatprep.subr.bf16.mxu0 0
        %856 = vmatpush1.bf16.msra.mxu0 0
        %857 = vmatprep.subr.bf16.mxu0 0
        %858 = vmatpush1.bf16.msra.mxu0 0
        %859 = vmatprep.subr.bf16.mxu0 0
        %860 = vmatpush1.bf16.msra.mxu0 0
        %861 = vmatprep.subr.bf16.mxu0 0
        %862 = vmatpush1.bf16.msra.mxu0 0
        %863 = vmatprep.subr.bf16.mxu0 0
        %864 = vmatpush1.bf16.msra.mxu0 0
        %865 = vmatprep.subr.bf16.mxu0 0
        %866 = vmatpush1.bf16.msra.mxu0 0
        %867 = vmatprep.mubr.bf16.mxu0 0
        %868 = vmatmul.mubr.bf16.gmra.mrb[0].mxu0 %v829
        %v869 = vpop.f32.mrb[0].mxu0
        %v870 = vadd.f32 0.0, %v869
        %v871 = vpop.f32.mrb[0].mxu0
        %v872 = vpop.f32.mrb[0].mxu0
        %v873 = vpop.f32.mrb[0].mxu0
        %874 = vdwg.mxu0
        %v876 = vsel %vm827, %v820, 0
        %v879 = vsel %vm831, %v824, 0
        %881 = vmatprep.subr.bf16.mxu0 0
        %882 = vmatpush1.bf16.msra.mxu0 %v879
        %883 = vmatprep.subr.bf16.mxu0 0
        %884 = vmatpush1.bf16.msra.mxu0 0
        %885 = vmatprep.subr.bf16.mxu0 0
        %886 = vmatpush1.bf16.msra.mxu0 0
        %887 = vmatprep.subr.bf16.mxu0 0
        %888 = vmatpush1.bf16.msra.mxu0 0
        %889 = vmatprep.subr.bf16.mxu0 0
        %890 = vmatpush1.bf16.msra.mxu0 0
        %891 = vmatprep.subr.bf16.mxu0 0
        %892 = vmatpush1.bf16.msra.mxu0 0
        %893 = vmatprep.subr.bf16.mxu0 0
        %894 = vmatpush1.bf16.msra.mxu0 0
        %895 = vmatprep.subr.bf16.mxu0 0
        %896 = vmatpush1.bf16.msra.mxu0 0
        %897 = vmatprep.subr.bf16.mxu0 0
        %898 = vmatpush1.bf16.msra.mxu0 0
        %899 = vmatprep.subr.bf16.mxu0 0
        %900 = vmatpush1.bf16.msra.mxu0 0
        %901 = vmatprep.subr.bf16.mxu0 0
        %902 = vmatpush1.bf16.msra.mxu0 0
        %903 = vmatprep.subr.bf16.mxu0 0
        %904 = vmatpush1.bf16.msra.mxu0 0
        %905 = vmatprep.subr.bf16.mxu0 0
        %906 = vmatpush1.bf16.msra.mxu0 0
        %907 = vmatprep.subr.bf16.mxu0 0
        %908 = vmatpush1.bf16.msra.mxu0 0
        %909 = vmatprep.subr.bf16.mxu0 0
        %910 = vmatpush1.bf16.msra.mxu0 0
        %911 = vmatprep.subr.bf16.mxu0 0
        %912 = vmatpush1.bf16.msra.mxu0 0
        %913 = vmatprep.mubr.bf16.mxu0 0
        %914 = vmatmul.mubr.bf16.gmra.mrb[0].mxu0 %v876
        %v915 = vpop.f32.mrb[0].mxu0
        %v916 = vadd.f32 0.0, %v915
        %v917 = vpop.f32.mrb[0].mxu0
        %v918 = vpop.f32.mrb[0].mxu0
        %v919 = vpop.f32.mrb[0].mxu0
        %920 = vdwg.mxu0
        %v922 = vsel %vm827, %v821, 0
        %v925 = vsel %vm831, %v825, 0
        %927 = vmatprep.subr.bf16.mxu0 0
        %928 = vmatpush1.bf16.msra.mxu0 %v925
        %929 = vmatprep.subr.bf16.mxu0 0
        %930 = vmatpush1.bf16.msra.mxu0 0
        %931 = vmatprep.subr.bf16.mxu0 0
        %932 = vmatpush1.bf16.msra.mxu0 0
        %933 = vmatprep.subr.bf16.mxu0 0
        %934 = vmatpush1.bf16.msra.mxu0 0
        %935 = vmatprep.subr.bf16.mxu0 0
        %936 = vmatpush1.bf16.msra.mxu0 0
        %937 = vmatprep.subr.bf16.mxu0 0
        %938 = vmatpush1.bf16.msra.mxu0 0
        %939 = vmatprep.subr.bf16.mxu0 0
        %940 = vmatpush1.bf16.msra.mxu0 0
        %941 = vmatprep.subr.bf16.mxu0 0
        %942 = vmatpush1.bf16.msra.mxu0 0
        %943 = vmatprep.subr.bf16.mxu0 0
        %944 = vmatpush1.bf16.msra.mxu0 0
        %945 = vmatprep.subr.bf16.mxu0 0
        %946 = vmatpush1.bf16.msra.mxu0 0
        %947 = vmatprep.subr.bf16.mxu0 0
        %948 = vmatpush1.bf16.msra.mxu0 0
        %949 = vmatprep.subr.bf16.mxu0 0
        %950 = vmatpush1.bf16.msra.mxu0 0
        %951 = vmatprep.subr.bf16.mxu0 0
        %952 = vmatpush1.bf16.msra.mxu0 0
        %953 = vmatprep.subr.bf16.mxu0 0
        %954 = vmatpush1.bf16.msra.mxu0 0
        %955 = vmatprep.subr.bf16.mxu0 0
        %956 = vmatpush1.bf16.msra.mxu0 0
        %957 = vmatprep.subr.bf16.mxu0 0
        %958 = vmatpush1.bf16.msra.mxu0 0
        %959 = vmatprep.mubr.bf16.mxu0 0
        %960 = vmatmul.mubr.bf16.gmra.mrb[0].mxu0 %v922
        %v961 = vpop.f32.mrb[0].mxu0
        %v962 = vadd.f32 0.0, %v961
        %v963 = vpop.f32.mrb[0].mxu0
        %v964 = vpop.f32.mrb[0].mxu0
        %v965 = vpop.f32.mrb[0].mxu0
        %966 = vdwg.mxu0
        %v968 = vsel %vm827, %v822, 0
        %v971 = vsel %vm831, %v826, 0
        %973 = vmatprep.subr.bf16.mxu0 0
        %974 = vmatpush1.bf16.msra.mxu0 %v971
        %975 = vmatprep.subr.bf16.mxu0 0
        %976 = vmatpush1.bf16.msra.mxu0 0
        %977 = vmatprep.subr.bf16.mxu0 0
        %978 = vmatpush1.bf16.msra.mxu0 0
        %979 = vmatprep.subr.bf16.mxu0 0
        %980 = vmatpush1.bf16.msra.mxu0 0
        %981 = vmatprep.subr.bf16.mxu0 0
        %982 = vmatpush1.bf16.msra.mxu0 0
        %983 = vmatprep.subr.bf16.mxu0 0
        %984 = vmatpush1.bf16.msra.mxu0 0
        %985 = vmatprep.subr.bf16.mxu0 0
        %986 = vmatpush1.bf16.msra.mxu0 0
        %987 = vmatprep.subr.bf16.mxu0 0
        %988 = vmatpush1.bf16.msra.mxu0 0
        %989 = vmatprep.subr.bf16.mxu0 0
        %990 = vmatpush1.bf16.msra.mxu0 0
        %991 = vmatprep.subr.bf16.mxu0 0
        %992 = vmatpush1.bf16.msra.mxu0 0
        %993 = vmatprep.subr.bf16.mxu0 0
        %994 = vmatpush1.bf16.msra.mxu0 0
        %995 = vmatprep.subr.bf16.mxu0 0
        %996 = vmatpush1.bf16.msra.mxu0 0
        %997 = vmatprep.subr.bf16.mxu0 0
        %998 = vmatpush1.bf16.msra.mxu0 0
        %999 = vmatprep.subr.bf16.mxu0 0
        %1000 = vmatpush1.bf16.msra.mxu0 0
        %1001 = vmatprep.subr.bf16.mxu0 0
        %1002 = vmatpush1.bf16.msra.mxu0 0
        %1003 = vmatprep.subr.bf16.mxu0 0
        %1004 = vmatpush1.bf16.msra.mxu0 0
        %1005 = vmatprep.mubr.bf16.mxu0 0
        %1006 = vmatmul.mubr.bf16.gmra.mrb[0].mxu0 %v968
        %v1007 = vpop.f32.mrb[0].mxu0
        %v1008 = vadd.f32 0.0, %v1007
        %v1009 = vpop.f32.mrb[0].mxu0
        %v1010 = vpop.f32.mrb[0].mxu0
        %v1011 = vpop.f32.mrb[0].mxu0
        %1012 = vdwg.mxu0
        %v1013 = vsel %vm827, %v870, -inf
        %1014 = vmax.xlane.f32.xlu0 %v1013
        %v1015 = vpop.xlane.xlu0 %1014
        %v1016 = vsel %vm827, %v916, -inf
        %1017 = vmax.xlane.f32.xlu0 %v1016
        %v1018 = vpop.xlane.xlu0 %1017
        %v1019 = vsel %vm827, %v962, -inf
        %1020 = vmax.xlane.f32.xlu0 %v1019
        %v1021 = vpop.xlane.xlu0 %1020
        %v1022 = vsel %vm827, %v1008, -inf
        %1023 = vmax.xlane.f32.xlu0 %v1022
        %v1024 = vpop.xlane.xlu0 %1023
        %v1025 = vsub.f32 %v870, %v1015
        %v1026 = vsub.f32 %v916, %v1018
        %v1027 = vsub.f32 %v962, %v1021
        %v1028 = vsub.f32 %v1008, %v1024
        %v1029 = vmul.f32 %v1025, 1.442695
        %v1030 = vpow.pop %v1029
        %v1031 = vmul.f32 %v1026, 1.442695
        %v1032 = vpow.pop %v1031
        %v1033 = vmul.f32 %v1027, 1.442695
        %v1034 = vpow.pop %v1033
        %v1035 = vmul.f32 %v1028, 1.442695
        %v1036 = vpow.pop %v1035
        %v1037 = vsel %vm827, %v1030, 0.0
        %1038 = vadd.xlane.f32.xlu0 %v1037
        %v1039 = vpop.xlane.xlu0 %1038
        %v1040 = vsel %vm827, %v1032, 0.0
        %1041 = vadd.xlane.f32.xlu0 %v1040
        %v1042 = vpop.xlane.xlu0 %1041
        %v1043 = vsel %vm827, %v1034, 0.0
        %1044 = vadd.xlane.f32.xlu0 %v1043
        %v1045 = vpop.xlane.xlu0 %1044
        %v1046 = vsel %vm827, %v1036, 0.0
        %1047 = vadd.xlane.f32.xlu0 %v1046
        %v1048 = vpop.xlane.xlu0 %1047
        %v1049 = vpack.c.bf16 %v1030, %v1030
        %v1050 = vpack.c.bf16 %v1032, %v1032
        %v1051 = vpack.c.bf16 %v1034, %v1034
        %v1052 = vpack.c.bf16 %v1036, %v1036
        %v1053 = vld [vmem:[#allocation4] sm:$0xf]
        %v1054 = vld [vmem:[#allocation4 + $0x4] sm:$0xf]
        %v1055 = vld [vmem:[#allocation4 + $0x8] sm:$0xf]
        %v1056 = vld [vmem:[#allocation4 + $0xc] sm:$0xf]
        %v1058 = vsel %vm827, %v1049, 0
        %v1061 = vsel %vm831, %v1053, 0
        %1063 = vmatprep.subr.bf16.mxu0 0
        %1064 = vmatpush1.bf16.msra.mxu0 %v1061
        %1065 = vmatprep.subr.bf16.mxu0 0
        %1066 = vmatpush1.bf16.msra.mxu0 0
        %1067 = vmatprep.subr.bf16.mxu0 0
        %1068 = vmatpush1.bf16.msra.mxu0 0
        %1069 = vmatprep.subr.bf16.mxu0 0
        %1070 = vmatpush1.bf16.msra.mxu0 0
        %1071 = vmatprep.subr.bf16.mxu0 0
        %1072 = vmatpush1.bf16.msra.mxu0 0
        %1073 = vmatprep.subr.bf16.mxu0 0
        %1074 = vmatpush1.bf16.msra.mxu0 0
        %1075 = vmatprep.subr.bf16.mxu0 0
        %1076 = vmatpush1.bf16.msra.mxu0 0
        %1077 = vmatprep.subr.bf16.mxu0 0
        %1078 = vmatpush1.bf16.msra.mxu0 0
        %1079 = vmatprep.subr.bf16.mxu0 0
        %1080 = vmatpush1.bf16.msra.mxu0 0
        %1081 = vmatprep.subr.bf16.mxu0 0
        %1082 = vmatpush1.bf16.msra.mxu0 0
        %1083 = vmatprep.subr.bf16.mxu0 0
        %1084 = vmatpush1.bf16.msra.mxu0 0
        %1085 = vmatprep.subr.bf16.mxu0 0
        %1086 = vmatpush1.bf16.msra.mxu0 0
        %1087 = vmatprep.subr.bf16.mxu0 0
        %1088 = vmatpush1.bf16.msra.mxu0 0
        %1089 = vmatprep.subr.bf16.mxu0 0
        %1090 = vmatpush1.bf16.msra.mxu0 0
        %1091 = vmatprep.subr.bf16.mxu0 0
        %1092 = vmatpush1.bf16.msra.mxu0 0
        %1093 = vmatprep.subr.bf16.mxu0 0
        %1094 = vmatpush1.bf16.msra.mxu0 0
        %1095 = vmatprep.mubr.bf16.mxu0 0
        %1096 = vmatmul.mubr.bf16.gmra.mrb[0].mxu0 %v1058
        %v1097 = vpop.f32.mrb[0].mxu0
        %v1098 = vadd.f32 0.0, %v1097
        %v1099 = vpop.f32.mrb[0].mxu0
        %v1100 = vpop.f32.mrb[0].mxu0
        %v1101 = vpop.f32.mrb[0].mxu0
        %1102 = vdwg.mxu0
        %v1104 = vsel %vm827, %v1050, 0
        %v1107 = vsel %vm831, %v1054, 0
        %1109 = vmatprep.subr.bf16.mxu0 0
        %1110 = vmatpush1.bf16.msra.mxu0 %v1107
        %1111 = vmatprep.subr.bf16.mxu0 0
        %1112 = vmatpush1.bf16.msra.mxu0 0
        %1113 = vmatprep.subr.bf16.mxu0 0
        %1114 = vmatpush1.bf16.msra.mxu0 0
        %1115 = vmatprep.subr.bf16.mxu0 0
        %1116 = vmatpush1.bf16.msra.mxu0 0
        %1117 = vmatprep.subr.bf16.mxu0 0
        %1118 = vmatpush1.bf16.msra.mxu0 0
        %1119 = vmatprep.subr.bf16.mxu0 0
        %1120 = vmatpush1.bf16.msra.mxu0 0
        %1121 = vmatprep.subr.bf16.mxu0 0
        %1122 = vmatpush1.bf16.msra.mxu0 0
        %1123 = vmatprep.subr.bf16.mxu0 0
        %1124 = vmatpush1.bf16.msra.mxu0 0
        %1125 = vmatprep.subr.bf16.mxu0 0
        %1126 = vmatpush1.bf16.msra.mxu0 0
        %1127 = vmatprep.subr.bf16.mxu0 0
        %1128 = vmatpush1.bf16.msra.mxu0 0
        %1129 = vmatprep.subr.bf16.mxu0 0
        %1130 = vmatpush1.bf16.msra.mxu0 0
        %1131 = vmatprep.subr.bf16.mxu0 0
        %1132 = vmatpush1.bf16.msra.mxu0 0
        %1133 = vmatprep.subr.bf16.mxu0 0
        %1134 = vmatpush1.bf16.msra.mxu0 0
        %1135 = vmatprep.subr.bf16.mxu0 0
        %1136 = vmatpush1.bf16.msra.mxu0 0
        %1137 = vmatprep.subr.bf16.mxu0 0
        %1138 = vmatpush1.bf16.msra.mxu0 0
        %1139 = vmatprep.subr.bf16.mxu0 0
        %1140 = vmatpush1.bf16.msra.mxu0 0
        %1141 = vmatprep.mubr.bf16.mxu0 0
        %1142 = vmatmul.mubr.bf16.gmra.mrb[0].mxu0 %v1104
        %v1143 = vpop.f32.mrb[0].mxu0
        %v1144 = vadd.f32 0.0, %v1143
        %v1145 = vpop.f32.mrb[0].mxu0
        %v1146 = vpop.f32.mrb[0].mxu0
        %v1147 = vpop.f32.mrb[0].mxu0
        %1148 = vdwg.mxu0
        %v1150 = vsel %vm827, %v1051, 0
        %v1153 = vsel %vm831, %v1055, 0
        %1155 = vmatprep.subr.bf16.mxu0 0
        %1156 = vmatpush1.bf16.msra.mxu0 %v1153
        %1157 = vmatprep.subr.bf16.mxu0 0
        %1158 = vmatpush1.bf16.msra.mxu0 0
        %1159 = vmatprep.subr.bf16.mxu0 0
        %1160 = vmatpush1.bf16.msra.mxu0 0
        %1161 = vmatprep.subr.bf16.mxu0 0
        %1162 = vmatpush1.bf16.msra.mxu0 0
        %1163 = vmatprep.subr.bf16.mxu0 0
        %1164 = vmatpush1.bf16.msra.mxu0 0
        %1165 = vmatprep.subr.bf16.mxu0 0
        %1166 = vmatpush1.bf16.msra.mxu0 0
        %1167 = vmatprep.subr.bf16.mxu0 0
        %1168 = vmatpush1.bf16.msra.mxu0 0
        %1169 = vmatprep.subr.bf16.mxu0 0
        %1170 = vmatpush1.bf16.msra.mxu0 0
        %1171 = vmatprep.subr.bf16.mxu0 0
        %1172 = vmatpush1.bf16.msra.mxu0 0
        %1173 = vmatprep.subr.bf16.mxu0 0
        %1174 = vmatpush1.bf16.msra.mxu0 0
        %1175 = vmatprep.subr.bf16.mxu0 0
        %1176 = vmatpush1.bf16.msra.mxu0 0
        %1177 = vmatprep.subr.bf16.mxu0 0
        %1178 = vmatpush1.bf16.msra.mxu0 0
        %1179 = vmatprep.subr.bf16.mxu0 0
        %1180 = vmatpush1.bf16.msra.mxu0 0
        %1181 = vmatprep.subr.bf16.mxu0 0
        %1182 = vmatpush1.bf16.msra.mxu0 0
        %1183 = vmatprep.subr.bf16.mxu0 0
        %1184 = vmatpush1.bf16.msra.mxu0 0
        %1185 = vmatprep.subr.bf16.mxu0 0
        %1186 = vmatpush1.bf16.msra.mxu0 0
        %1187 = vmatprep.mubr.bf16.mxu0 0
        %1188 = vmatmul.mubr.bf16.gmra.mrb[0].mxu0 %v1150
        %v1189 = vpop.f32.mrb[0].mxu0
        %v1190 = vadd.f32 0.0, %v1189
        %v1191 = vpop.f32.mrb[0].mxu0
        %v1192 = vpop.f32.mrb[0].mxu0
        %v1193 = vpop.f32.mrb[0].mxu0
        %1194 = vdwg.mxu0
        %v1196 = vsel %vm827, %v1052, 0
        %v1199 = vsel %vm831, %v1056, 0
        %1201 = vmatprep.subr.bf16.mxu0 0
        %1202 = vmatpush1.bf16.msra.mxu0 %v1199
        %1203 = vmatprep.subr.bf16.mxu0 0
        %1204 = vmatpush1.bf16.msra.mxu0 0
        %1205 = vmatprep.subr.bf16.mxu0 0
        %1206 = vmatpush1.bf16.msra.mxu0 0
        %1207 = vmatprep.subr.bf16.mxu0 0
        %1208 = vmatpush1.bf16.msra.mxu0 0
        %1209 = vmatprep.subr.bf16.mxu0 0
        %1210 = vmatpush1.bf16.msra.mxu0 0
        %1211 = vmatprep.subr.bf16.mxu0 0
        %1212 = vmatpush1.bf16.msra.mxu0 0
        %1213 = vmatprep.subr.bf16.mxu0 0
        %1214 = vmatpush1.bf16.msra.mxu0 0
        %1215 = vmatprep.subr.bf16.mxu0 0
        %1216 = vmatpush1.bf16.msra.mxu0 0
        %1217 = vmatprep.subr.bf16.mxu0 0
        %1218 = vmatpush1.bf16.msra.mxu0 0
        %1219 = vmatprep.subr.bf16.mxu0 0
        %1220 = vmatpush1.bf16.msra.mxu0 0
        %1221 = vmatprep.subr.bf16.mxu0 0
        %1222 = vmatpush1.bf16.msra.mxu0 0
        %1223 = vmatprep.subr.bf16.mxu0 0
        %1224 = vmatpush1.bf16.msra.mxu0 0
        %1225 = vmatprep.subr.bf16.mxu0 0
        %1226 = vmatpush1.bf16.msra.mxu0 0
        %1227 = vmatprep.subr.bf16.mxu0 0
        %1228 = vmatpush1.bf16.msra.mxu0 0
        %1229 = vmatprep.subr.bf16.mxu0 0
        %1230 = vmatpush1.bf16.msra.mxu0 0
        %1231 = vmatprep.subr.bf16.mxu0 0
        %1232 = vmatpush1.bf16.msra.mxu0 0
        %1233 = vmatprep.mubr.bf16.mxu0 0
        %1234 = vmatmul.mubr.bf16.gmra.mrb[0].mxu0 %v1196
        %v1235 = vpop.f32.mrb[0].mxu0
        %v1236 = vadd.f32 0.0, %v1235
        %v1237 = vpop.f32.mrb[0].mxu0
        %v1238 = vpop.f32.mrb[0].mxu0
        %v1239 = vpop.f32.mrb[0].mxu0
        %1240 = vdwg.mxu0
        %v1241 = vrcp.pop %v1039
        %v1242 = vrcp.pop %v1042
        %v1243 = vrcp.pop %v1045
        %v1244 = vrcp.pop %v1048
        %v1245 = vmul.f32 %v1098, %v1241
        %v1246 = vmul.f32 %v1144, %v1242
        %v1247 = vmul.f32 %v1190, %v1243
        %v1248 = vmul.f32 %v1236, %v1244
        %v1249 = vcombine.low %v1245, %v1247
        %v1250 = vcombine.high %v1245, %v1247
        %v1252 = vunpack.c.l.s4 1983009808
        %v1253 = vunpack.c.0.s8 %v1252
        %v1254 = vlaneseq
        %v1255 = vshrl.u32 %v1254, 7
        %v1256 = vsub.s32 %v1253, %v1255
        %v1257 = vrot.slane %v1249, %v1256
        %v1259 = vunpack.c.l.s4 1983009808
        %v1260 = vunpack.c.0.s8 %v1259
        %v1261 = vlaneseq
        %v1262 = vshrl.u32 %v1261, 7
        %v1263 = vsub.s32 %v1260, %v1262
        %v1264 = vrot.slane %v1250, %v1263
        %v1265 = vcombine.low %v1246, %v1248
        %v1266 = vcombine.high %v1246, %v1248
        %v1268 = vunpack.c.l.s4 1983009808
        %v1269 = vunpack.c.0.s8 %v1268
        %v1270 = vlaneseq
        %v1271 = vshrl.u32 %v1270, 7
        %v1272 = vsub.s32 %v1269, %v1271
        %v1273 = vrot.slane %v1265, %v1272
        %v1275 = vunpack.c.l.s4 1983009808
        %v1276 = vunpack.c.0.s8 %v1275
        %v1277 = vlaneseq
        %v1278 = vshrl.u32 %v1277, 7
        %v1279 = vsub.s32 %v1276, %v1278
        %v1280 = vrot.slane %v1266, %v1279
        %v1281 = vcombine.low %v1257, %v1273
        %v1282 = vcombine.high %v1257, %v1273
        %v1284 = vunpack.c.l.s4 1934713408
        %v1285 = vunpack.c.0.s8 %v1284
        %v1286 = vlaneseq
        %v1287 = vshrl.u32 %v1286, 7
        %v1288 = vsub.s32 %v1285, %v1287
        %v1289 = vrot.slane %v1281, %v1288
        %v1291 = vunpack.c.l.s4 1934713408
        %v1292 = vunpack.c.0.s8 %v1291
        %v1293 = vlaneseq
        %v1294 = vshrl.u32 %v1293, 7
        %v1295 = vsub.s32 %v1292, %v1294
        %v1296 = vrot.slane %v1282, %v1295
        %v1297 = vcombine.low %v1264, %v1280
        %v1298 = vcombine.high %v1264, %v1280
        %v1300 = vunpack.c.l.s4 1934713408
        %v1301 = vunpack.c.0.s8 %v1300
        %v1302 = vlaneseq
        %v1303 = vshrl.u32 %v1302, 7
        %v1304 = vsub.s32 %v1301, %v1303
        %v1305 = vrot.slane %v1297, %v1304
        %v1307 = vunpack.c.l.s4 1934713408
        %v1308 = vunpack.c.0.s8 %v1307
        %v1309 = vlaneseq
        %v1310 = vshrl.u32 %v1309, 7
        %v1311 = vsub.s32 %v1308, %v1310
        %v1312 = vrot.slane %v1298, %v1311
        %v1313 = vcombine.high %v1289, 0.0
        %v1314 = vcombine.high %v1296, 0.0
        %v1315 = vcombine.high %v1305, 0.0
        %v1316 = vcombine.high %v1312, 0.0
        %v1317 = vcombine.low %v1289, %v1296
        %v1319 = vunpack.c.l.s4 1983009808
        %v1320 = vunpack.c.0.s8 %v1319
        %v1321 = vlaneseq
        %v1322 = vshrl.u32 %v1321, 7
        %v1323 = vsub.s32 %v1320, %v1322
        %v1324 = vrot.slane %v1317, %v1323
        %v1325 = vcombine.low %v1313, %v1314
        %v1327 = vunpack.c.l.s4 1983009808
        %v1328 = vunpack.c.0.s8 %v1327
        %v1329 = vlaneseq
        %v1330 = vshrl.u32 %v1329, 7
        %v1331 = vsub.s32 %v1328, %v1330
        %v1332 = vrot.slane %v1325, %v1331
        %v1333 = vcombine.low %v1305, %v1312
        %v1335 = vunpack.c.l.s4 1983009808
        %v1336 = vunpack.c.0.s8 %v1335
        %v1337 = vlaneseq
        %v1338 = vshrl.u32 %v1337, 7
        %v1339 = vsub.s32 %v1336, %v1338
        %v1340 = vrot.slane %v1333, %v1339
        %v1341 = vcombine.low %v1315, %v1316
        %v1343 = vunpack.c.l.s4 1983009808
        %v1344 = vunpack.c.0.s8 %v1343
        %v1345 = vlaneseq
        %v1346 = vshrl.u32 %v1345, 7
        %v1347 = vsub.s32 %v1344, %v1346
        %v1348 = vrot.slane %v1341, %v1347
        %v1349 = vcombine.low %v1324, %v1332
        %v1350 = vcombine.high %v1324, %v1332
        %v1352 = vunpack.c.l.s4 1934713408
        %v1353 = vunpack.c.0.s8 %v1352
        %v1354 = vlaneseq
        %v1355 = vshrl.u32 %v1354, 7
        %v1356 = vsub.s32 %v1353, %v1355
        %v1357 = vrot.slane %v1349, %v1356
        %v1359 = vunpack.c.l.s4 1934713408
        %v1360 = vunpack.c.0.s8 %v1359
        %v1361 = vlaneseq
        %v1362 = vshrl.u32 %v1361, 7
        %v1363 = vsub.s32 %v1360, %v1362
        %v1364 = vrot.slane %v1350, %v1363
        %v1365 = vcombine.low %v1340, %v1348
        %v1366 = vcombine.high %v1340, %v1348
        %v1368 = vunpack.c.l.s4 1934713408
        %v1369 = vunpack.c.0.s8 %v1368
        %v1370 = vlaneseq
        %v1371 = vshrl.u32 %v1370, 7
        %v1372 = vsub.s32 %v1369, %v1371
        %v1373 = vrot.slane %v1365, %v1372
        %v1375 = vunpack.c.l.s4 1934713408
        %v1376 = vunpack.c.0.s8 %v1375
        %v1377 = vlaneseq
        %v1378 = vshrl.u32 %v1377, 7
        %v1379 = vsub.s32 %v1376, %v1378
        %v1380 = vrot.slane %v1366, %v1379
        %v1381 = vcombine.low %v1357, %v1373
        %v1382 = vcombine.high %v1357, %v1373
        %v1383 = vcombine.low %v1364, %v1380
        %v1384 = vcombine.high %v1364, %v1380
        %1386 = vrot.lane.b32.xlu0 %v1382, 8
        %v1387 = vpop.permute.xlu0 %1386
        %1390 = vrot.lane.b32.xlu0 %v1383, 16
        %v1391 = vpop.permute.xlu0 %1390
        %1394 = vrot.lane.b32.xlu0 %v1384, 24
        %v1395 = vpop.permute.xlu0 %1394
        %v1397 = vsel %vm827, %v1381, %v1387
        %vm1398 = vcmask 130048
        %v1399 = vsel %vm1398, %v1397, %v1391
        %vm1400 = vcmask 195584
        %v1401 = vsel %vm1400, %v1399, %v1395
        %v1402 = vpack.c.bf16 %v1401, %v1401
        %v1403 = vld [vmem:[%s6] sm:$0xf]
        %v1404 = vld [vmem:[%s6 + $0x4] sm:$0xf]
        %v1405 = vld [vmem:[%s6 + $0x8] sm:$0xf]
        %v1406 = vld [vmem:[%s6 + $0xc] sm:$0xf]
        %v1407 = vld [vmem:[#allocation5] sm:$0x1]
        %v1409 = vlaneseq
        %v1410 = vshrl.u32 %v1409, 7
        %v1411 = vsub.s32 0, %v1410
        %v1412 = vrot.slane %v1407, %v1411
        %v1418 = vunpack.c.l.b16 %v1403
        %v1419 = vunpack.c.l.b16 %v1404
        %v1420 = vunpack.c.l.b16 %v1405
        %v1421 = vunpack.c.l.b16 %v1406
        %v1422 = vpack.c.b16 %v1419, %v1418
        %v1423 = vpack.c.b16 %v1421, %v1420
        %vm1426 = vcmask 261120
        %v1428 = vsel %vm1426, %v1402, 0
        %1430 = vmatprep.subr.bf16.mxu0 0
        %1431 = vmatpush1.bf16.msra.mxu0 %v1422
        %1432 = vmatprep.subr.bf16.mxu0 0
        %1433 = vmatpush1.bf16.msra.mxu0 %v1423
        %1434 = vmatprep.subr.bf16.mxu0 0
        %1435 = vmatpush1.bf16.msra.mxu0 0
        %1436 = vmatprep.subr.bf16.mxu0 0
        %1437 = vmatpush1.bf16.msra.mxu0 0
        %1438 = vmatprep.subr.bf16.mxu0 0
        %1439 = vmatpush1.bf16.msra.mxu0 0
        %1440 = vmatprep.subr.bf16.mxu0 0
        %1441 = vmatpush1.bf16.msra.mxu0 0
        %1442 = vmatprep.subr.bf16.mxu0 0
        %1443 = vmatpush1.bf16.msra.mxu0 0
        %1444 = vmatprep.subr.bf16.mxu0 0
        %1445 = vmatpush1.bf16.msra.mxu0 0
        %1446 = vmatprep.subr.bf16.mxu0 0
        %1447 = vmatpush1.bf16.msra.mxu0 0
        %1448 = vmatprep.subr.bf16.mxu0 0
        %1449 = vmatpush1.bf16.msra.mxu0 0
        %1450 = vmatprep.subr.bf16.mxu0 0
        %1451 = vmatpush1.bf16.msra.mxu0 0
        %1452 = vmatprep.subr.bf16.mxu0 0
        %1453 = vmatpush1.bf16.msra.mxu0 0
        %1454 = vmatprep.subr.bf16.mxu0 0
        %1455 = vmatpush1.bf16.msra.mxu0 0
        %1456 = vmatprep.subr.bf16.mxu0 0
        %1457 = vmatpush1.bf16.msra.mxu0 0
        %1458 = vmatprep.subr.bf16.mxu0 0
        %1459 = vmatpush1.bf16.msra.mxu0 0
        %1460 = vmatprep.subr.bf16.mxu0 0
        %1461 = vmatpush1.bf16.msra.mxu0 0
        %1462 = vmatprep.mubr.bf16.mxu0 0
        %1463 = vmatmul.mubr.bf16.gmra.mrb[0].mxu0 %v1428
        %v1464 = vpop.f32.mrb[0].mxu0
        %v1465 = vadd.f32 %v1412, %v1464
        %v1466 = vpop.f32.mrb[0].mxu0
        %v1467 = vpop.f32.mrb[0].mxu0
        %v1468 = vpop.f32.mrb[0].mxu0
        %1469 = vdwg.mxu0
        %s1470 = scalar_lea.vmem %s581, %s814
        %v1471 = vld [vmem:[%s1470] sm:$0xff]
        %v1472 = vadd.f32 %v1471, %v1465
        %v1473 = vld [vmem:[#allocation8] sm:$0x1]
        %v1474 = vld [vmem:[#allocation10] sm:$0x1]
        %v1475 = vsel %vm1426, %v1472, 0.0
        %1476 = vadd.xlane.f32.xlu0 %v1475
        %v1477 = vpop.xlane.xlu0 %1476
        %v1478 = vrcp.pop 32.0
        %v1479 = vmul.f32 %v1477, %v1478
        %v1480 = vsub.f32 %v1472, %v1479
        %v1481 = vmul.f32 %v1480, %v1480
        %v1482 = vsel %vm1426, %v1481, 0.0
        %1483 = vadd.xlane.f32.xlu0 %v1482
        %v1484 = vpop.xlane.xlu0 %1483
        %v1485 = vmul.f32 %v1484, %v1478
        %v1486 = vadd.f32 %v1485, 1e-05
        %v1487 = vrsqrt.pop %v1486
        %v1488 = vmul.f32 %v1480, %v1487
        %v1490 = vlaneseq
        %v1491 = vshrl.u32 %v1490, 7
        %v1492 = vsub.s32 0, %v1491
        %v1493 = vrot.slane %v1473, %v1492
        %v1495 = vmul.f32 %v1488, %v1493
        %v1497 = vlaneseq
        %v1498 = vshrl.u32 %v1497, 7
        %v1499 = vsub.s32 0, %v1498
        %v1500 = vrot.slane %v1474, %v1499
        %v1502 = vadd.f32 %v1495, %v1500
        %v1503 = vpack.c.bf16 %v1502, %v1502
        %v1504 = vld [vmem:[%s10] sm:$0xf]
        %v1505 = vld [vmem:[%s10 + $0x4] sm:$0xf]
        %v1506 = vld [vmem:[%s10 + $0x8] sm:$0xf]
        %v1507 = vld [vmem:[%s10 + $0xc] sm:$0xf]
        %v1508 = vld [vmem:[%s11] sm:$0x1]
        %v1510 = vlaneseq
        %v1511 = vshrl.u32 %v1510, 7
        %v1512 = vsub.s32 0, %v1511
        %v1513 = vrot.slane %v1508, %v1512
        %v1519 = vunpack.c.l.b16 %v1504
        %v1520 = vunpack.c.l.b16 %v1505
        %v1521 = vunpack.c.l.b16 %v1506
        %v1522 = vunpack.c.l.b16 %v1507
        %v1523 = vpack.c.b16 %v1520, %v1519
        %v1524 = vpack.c.b16 %v1522, %v1521
        %v1528 = vsel %vm1426, %v1503, 0
        %1530 = vmatprep.subr.bf16.mxu0 0
        %1531 = vmatpush1.bf16.msra.mxu0 %v1523
        %1532 = vmatprep.subr.bf16.mxu0 0
        %1533 = vmatpush1.bf16.msra.mxu0 %v1524
        %1534 = vmatprep.subr.bf16.mxu0 0
        %1535 = vmatpush1.bf16.msra.mxu0 0
        %1536 = vmatprep.subr.bf16.mxu0 0
        %1537 = vmatpush1.bf16.msra.mxu0 0
        %1538 = vmatprep.subr.bf16.mxu0 0
        %1539 = vmatpush1.bf16.msra.mxu0 0
        %1540 = vmatprep.subr.bf16.mxu0 0
        %1541 = vmatpush1.bf16.msra.mxu0 0
        %1542 = vmatprep.subr.bf16.mxu0 0
        %1543 = vmatpush1.bf16.msra.mxu0 0
        %1544 = vmatprep.subr.bf16.mxu0 0
        %1545 = vmatpush1.bf16.msra.mxu0 0
        %1546 = vmatprep.subr.bf16.mxu0 0
        %1547 = vmatpush1.bf16.msra.mxu0 0
        %1548 = vmatprep.subr.bf16.mxu0 0
        %1549 = vmatpush1.bf16.msra.mxu0 0
        %1550 = vmatprep.subr.bf16.mxu0 0
        %1551 = vmatpush1.bf16.msra.mxu0 0
        %1552 = vmatprep.subr.bf16.mxu0 0
        %1553 = vmatpush1.bf16.msra.mxu0 0
        %1554 = vmatprep.subr.bf16.mxu0 0
        %1555 = vmatpush1.bf16.msra.mxu0 0
        %1556 = vmatprep.subr.bf16.mxu0 0
        %1557 = vmatpush1.bf16.msra.mxu0 0
        %1558 = vmatprep.subr.bf16.mxu0 0
        %1559 = vmatpush1.bf16.msra.mxu0 0
        %1560 = vmatprep.subr.bf16.mxu0 0
        %1561 = vmatpush1.bf16.msra.mxu0 0
        %1562 = vmatprep.mubr.bf16.mxu0 0
        %1563 = vmatmul.mubr.bf16.gmra.mrb[0].mxu0 %v1528
        %v1564 = vpop.f32.mrb[0].mxu0
        %v1565 = vadd.f32 %v1513, %v1564
        %v1566 = vpop.f32.mrb[0].mxu0
        %v1567 = vpop.f32.mrb[0].mxu0
        %v1568 = vpop.f32.mrb[0].mxu0
        %1569 = vdwg.mxu0
        %v1570 = vmax.f32 %v1565, 0.0
        %v1571 = vpack.c.bf16 %v1570, %v1570
        %v1572 = vld [vmem:[%s12] sm:$0xf]
        %v1573 = vld [vmem:[%s12 + $0x4] sm:$0xf]
        %v1574 = vld [vmem:[%s12 + $0x8] sm:$0xf]
        %v1575 = vld [vmem:[%s12 + $0xc] sm:$0xf]
        %v1576 = vld [vmem:[%s12 + $0x10] sm:$0xf]
        %v1577 = vld [vmem:[%s12 + $0x14] sm:$0xf]
        %v1578 = vld [vmem:[%s12 + $0x18] sm:$0xf]
        %v1579 = vld [vmem:[%s12 + $0x1c] sm:$0xf]
        %v1580 = vld [vmem:[%s12 + $0x20] sm:$0xf]
        %v1581 = vld [vmem:[%s12 + $0x24] sm:$0xf]
        %v1582 = vld [vmem:[%s12 + $0x28] sm:$0xf]
        %v1583 = vld [vmem:[%s12 + $0x2c] sm:$0xf]
        %v1584 = vld [vmem:[%s12 + $0x30] sm:$0xf]
        %v1585 = vld [vmem:[%s12 + $0x34] sm:$0xf]
        %v1586 = vld [vmem:[%s12 + $0x38] sm:$0xf]
        %v1587 = vld [vmem:[%s12 + $0x3c] sm:$0xf]
        %v1588 = vld [vmem:[%s13] sm:$0x1]
        %v1590 = vlaneseq
        %v1591 = vshrl.u32 %v1590, 7
        %v1592 = vsub.s32 0, %v1591
        %v1593 = vrot.slane %v1588, %v1592
        %v1611 = vunpack.c.l.b16 %v1572
        %v1612 = vunpack.c.l.b16 %v1573
        %v1613 = vunpack.c.l.b16 %v1574
        %v1614 = vunpack.c.l.b16 %v1575
        %v1615 = vunpack.c.l.b16 %v1576
        %v1616 = vunpack.c.l.b16 %v1577
        %v1617 = vunpack.c.l.b16 %v1578
        %v1618 = vunpack.c.l.b16 %v1579
        %v1619 = vunpack.c.l.b16 %v1580
        %v1620 = vunpack.c.l.b16 %v1581
        %v1621 = vunpack.c.l.b16 %v1582
        %v1622 = vunpack.c.l.b16 %v1583
        %v1623 = vunpack.c.l.b16 %v1584
        %v1624 = vunpack.c.l.b16 %v1585
        %v1625 = vunpack.c.l.b16 %v1586
        %v1626 = vunpack.c.l.b16 %v1587
        %v1627 = vpack.c.b16 %v1612, %v1611
        %v1628 = vpack.c.b16 %v1614, %v1613
        %v1629 = vpack.c.b16 %v1616, %v1615
        %v1630 = vpack.c.b16 %v1618, %v1617
        %v1631 = vpack.c.b16 %v1620, %v1619
        %v1632 = vpack.c.b16 %v1622, %v1621
        %v1633 = vpack.c.b16 %v1624, %v1623
        %v1634 = vpack.c.b16 %v1626, %v1625
        %1643 = vmatprep.subr.bf16.mxu0 0
        %1644 = vmatpush1.bf16.msra.mxu0 %v1627
        %1645 = vmatprep.subr.bf16.mxu0 0
        %1646 = vmatpush1.bf16.msra.mxu0 %v1628
        %1647 = vmatprep.subr.bf16.mxu0 0
        %1648 = vmatpush1.bf16.msra.mxu0 %v1629
        %1649 = vmatprep.subr.bf16.mxu0 0
        %1650 = vmatpush1.bf16.msra.mxu0 %v1630
        %1651 = vmatprep.subr.bf16.mxu0 0
        %1652 = vmatpush1.bf16.msra.mxu0 %v1631
        %1653 = vmatprep.subr.bf16.mxu0 0
        %1654 = vmatpush1.bf16.msra.mxu0 %v1632
        %1655 = vmatprep.subr.bf16.mxu0 0
        %1656 = vmatpush1.bf16.msra.mxu0 %v1633
        %1657 = vmatprep.subr.bf16.mxu0 0
        %1658 = vmatpush1.bf16.msra.mxu0 %v1634
        %1659 = vmatprep.subr.bf16.mxu0 0
        %1660 = vmatpush1.bf16.msra.mxu0 0
        %1661 = vmatprep.subr.bf16.mxu0 0
        %1662 = vmatpush1.bf16.msra.mxu0 0
        %1663 = vmatprep.subr.bf16.mxu0 0
        %1664 = vmatpush1.bf16.msra.mxu0 0
        %1665 = vmatprep.subr.bf16.mxu0 0
        %1666 = vmatpush1.bf16.msra.mxu0 0
        %1667 = vmatprep.subr.bf16.mxu0 0
        %1668 = vmatpush1.bf16.msra.mxu0 0
        %1669 = vmatprep.subr.bf16.mxu0 0
        %1670 = vmatpush1.bf16.msra.mxu0 0
        %1671 = vmatprep.subr.bf16.mxu0 0
        %1672 = vmatpush1.bf16.msra.mxu0 0
        %1673 = vmatprep.subr.bf16.mxu0 0
        %1674 = vmatpush1.bf16.msra.mxu0 0
        %1675 = vmatprep.mubr.bf16.mxu0 0
        %1676 = vmatmul.mubr.bf16.gmra.mrb[0].mxu0 %v1571
        %v1677 = vpop.f32.mrb[0].mxu0
        %v1678 = vadd.f32 %v1593, %v1677
        %v1679 = vpop.f32.mrb[0].mxu0
        %v1680 = vpop.f32.mrb[0].mxu0
        %v1681 = vpop.f32.mrb[0].mxu0
        %1682 = vdwg.mxu0
        %v1683 = vadd.f32 %v1502, %v1678
        %v1684 = vld [vmem:[%s14] sm:$0x1]
        %v1685 = vld [vmem:[%s15] sm:$0x1]
        %v1686 = vsel %vm1426, %v1683, 0.0
        %1687 = vadd.xlane.f32.xlu0 %v1686
        %v1688 = vpop.xlane.xlu0 %1687
        %v1689 = vmul.f32 %v1688, %v1478
        %v1690 = vsub.f32 %v1683, %v1689
        %v1691 = vmul.f32 %v1690, %v1690
        %v1692 = vsel %vm1426, %v1691, 0.0
        %1693 = vadd.xlane.f32.xlu0 %v1692
        %v1694 = vpop.xlane.xlu0 %1693
        %v1695 = vmul.f32 %v1694, %v1478
        %v1696 = vadd.f32 %v1695, 1e-05
        %v1697 = vrsqrt.pop %v1696
        %v1698 = vmul.f32 %v1690, %v1697
        %v1700 = vlaneseq
        %v1701 = vshrl.u32 %v1700, 7
        %v1702 = vsub.s32 0, %v1701
        %v1703 = vrot.slane %v1684, %v1702
        %v1705 = vmul.f32 %v1698, %v1703
        %v1707 = vlaneseq
        %v1708 = vshrl.u32 %v1707, 7
        %v1709 = vsub.s32 0, %v1708
        %v1710 = vrot.slane %v1685, %v1709
        %v1712 = vadd.f32 %v1705, %v1710
        %1713 = vst.msk [vmem:[%s577] sm:$0xff] %vm1426, %v1712
        %s1714 = sand.u32 %s400, 1
        %s1715 = scalar_lea.sflag [#allocation7], %s1714
        %s1716 = sand.u32 %s400, 1
        %s1717 = smul.addr %s1716, 8
        %s1718 = scalar_lea.vmem [#allocation11], %s1717
        // Predicated region
        $region101: #{tpu_custom_call.1} parent=83 // pred_check
          %p1719 = pneg %p410
        $region102: #{tpu_custom_call.1} parent=83 // pred_check_branch
          %1721 = sbr.rel (%p1719) target = $region104
        $region103: #{tpu_custom_call.1} parent=83 // pred_region
          %s1723 = ssub.s32 128, 128
          %1724 = vsyncadd %s1715, %s1723
          %s1725 = sadd.s32 %s37, %s36
          %s1726 = smul.addr %s1725, 128
          %s1727 = scalar_lea.hbm %s16, %s1726
          %s1729 = sshll.u32 %s1718, 4
          %s1730 = int_to_ptr.vmem [resolvable:$true] %s1729
          %1732 = dma.vmem_to_hbm [thread:$0]  %s1730, 128, %s1727, %s1715
        $region104: #{tpu_custom_call.1} parent=83 // pred_fallthru
          _
      $region84: #{tpu_custom_call.1} parent=5 // pred_fallthru
        _
      %p1733 = scmp.le.s32.totalorder 2, %s27
      // Predicated region
      $region105: #{tpu_custom_call.1} parent=5 // pred_check
        %p1734 = pneg %p1733
      $region106: #{tpu_custom_call.1} parent=5 // pred_check_branch
        %1736 = sbr.rel (%p1734) target = $region108
      $region107: #{tpu_custom_call.1} parent=5 // pred_region
        %s1737 = ssub.s32 %s27, 2
        // Predicated region
        $region109: #{tpu_custom_call.1} parent=107 // pred_check
          %p1738 = pneg %p416
        $region110: #{tpu_custom_call.1} parent=107 // pred_check_branch
          %1740 = sbr.rel (%p1738) target = $region112
        $region111: #{tpu_custom_call.1} parent=107 // pred_region
          %s1741 = sand.u32 %s401, 1
          %s1742 = scalar_lea.sflag [#allocation7], %s1741
          %s1743 = sand.u32 %s401, 1
          %s1744 = smul.addr %s1743, 8
          %s1745 = scalar_lea.vmem [#allocation11], %s1744
          %1746 = dma.done %s1742, 128
        $region112: #{tpu_custom_call.1} parent=107 // pred_fallthru
          _
      $region108: #{tpu_custom_call.1} parent=5 // pred_fallthru
        _
    $region6: #{tpu_custom_call.1} parent=1 // loop_footer
      %s31 = sadd.s32 1, %s27
    $region7: #{tpu_custom_call.1} parent=1 // loop_footer_branch
      %26 = sbr.rel target = $region3
    $region8: #{tpu_custom_call.1} parent=1 // loop_exit
      _
    %1747 = vsyncpa [#allocation6], 1
    %s1748 = scalar_lea.sflag [#allocation6], 1
    %1749 = vsyncpa %s1748, 1
    %1750 = vsyncpa [#allocation9], 1
    %1751 = vsyncpa [#allocation7], 1
    %s1752 = scalar_lea.sflag [#allocation7], 1
    %1753 = vsyncpa %s1752, 1

</llo_original>
